<compile_context>
chip_gen: v5e
topology: v5e:2x2
jax: 0.10.0
libtpu: 0.0.40
codegen_flags: <defaults>
</compile_context>

<pallas_src>
import math

import jax
import jax.numpy as jnp
from jax import lax
from jax.experimental import pallas as pl
from jax.experimental.pallas import tpu as pltpu

_LANE = 128


def bin_kernel(x_ref, l1_ref, l2_ref, bias_ref, o_ref):
    # x_ref block: (D, T, TB) -- batch columns on the lane axis.
    # l1_ref: (1, T, 1) = y1*l1 ; l2_ref: (D, 1, 1) = y2*l2 ; bias_ref: (D, T, 1) = y1*B1 + y2*B2.
    x = x_ref[...].astype(jnp.float32)                       # upcast in-kernel (bf16 ingest OK)
    D, T, _ = x.shape
    # Degenerate dims: torch.std(ddof=1) over a length-1 axis yields NaN -> reproduce it.
    inv_tm1 = (1.0 / (T - 1)) if T > 1 else float("nan")
    inv_dm1 = (1.0 / (D - 1)) if D > 1 else float("nan")

    # ---- time-axis normalization (PyTorch axis=2) -> X2 component ----
    mean_t = jnp.mean(x, axis=1, keepdims=True)              # (D, 1, TB) sublane reduction
    ct = x - mean_t                                          # centered, reused for var and z
    var_t = jnp.sum(ct * ct, axis=1, keepdims=True) * inv_tm1
    # std < 1e-4  <=>  var < 1e-8 ; clamp picks inv_std = 1
    inv_std_t = jnp.where(var_t < 1e-8, jnp.ones_like(var_t), lax.rsqrt(var_t))

    # ---- feature-axis normalization (PyTorch axis=1) -> X1 component ----
    mean_d = jnp.mean(x, axis=0, keepdims=True)              # (1, T, TB) plain vreg adds
    cd = x - mean_d
    var_d = jnp.sum(cd * cd, axis=0, keepdims=True) * inv_dm1
    inv_std_d = lax.rsqrt(var_d)                             # NOTE: reference applies no clamp here

    # Scale-before-broadcast: multiply the small reduced tensors, not the full block.
    s1 = l1_ref[...] * inv_std_d                             # (1, T, TB)
    s2 = l2_ref[...] * inv_std_t                             # (D, 1, TB)
    o_ref[...] = (s1 * cd + s2 * ct + bias_ref[...]).astype(o_ref.dtype)


def _tensorcores_per_chip() -> int:
    """Only v7x exposes 2 TensorCores per chip to one Pallas grid; v5e/v6e have 1."""
    try:
        kind = jax.devices()[0].device_kind.lower()
    except Exception:
        return 1
    return 2 if "v7" in kind else 1


def _pick_batch_tile(batch: int, d: int, t: int, num_tc: int) -> int:
    """Lane-dense batch tile (multiple of 128) targeting ~4 MiB f32 blocks.
    Single-TC chips (v5e/v6e): biggest block that fits (grid is a serial loop).
    2-TC chips (v7x): keep the grid step count even so both cores get work."""
    per_col_bytes = d * t * 4                    # f32 working bytes per batch column
    target_block_bytes = 4 << 20                 # ~4 MiB (review: 2-4 MiB sweet spot)
    cols = max(1, target_block_bytes // per_col_bytes)
    if batch <= _LANE:
        return batch                             # whole (small) batch in one block
    tb = min(cols, batch)
    tb = max(_LANE, (tb // _LANE) * _LANE)       # lane-dense: multiple of 128
    if num_tc > 1:
        steps = pl.cdiv(batch, tb)
        if steps % 2:
            steps += 1                           # even grid -> balanced across 2 TCs
        tb = max(_LANE, pl.cdiv(pl.cdiv(batch, steps), _LANE) * _LANE)
    return min(tb, batch)


def bin_forward(x, l1, b1, l2, b2, y1, y2):
    """x: (B, D, T); l1,b1: (t1,1); l2,b2: (d1,1); y1,y2: (1,). Returns (B, D, T) in x.dtype."""
    B, D, T = x.shape
    out_dtype = x.dtype

    # Parameter "data mutation" from the reference forward (tiny, done on the host graph).
    y1c = jnp.where(y1 < 0, jnp.full_like(y1, 0.01), y1).astype(jnp.float32)
    y2c = jnp.where(y2 < 0, jnp.full_like(y2, 0.01), y2).astype(jnp.float32)

    # Fold y1/y2 into the affine params; precombine both biases into one (D, T, 1) array.
    l1_k = (y1c * l1.astype(jnp.float32).reshape(-1)).reshape(1, T, 1)      # (1, T, 1)
    l2_k = (y2c * l2.astype(jnp.float32).reshape(-1)).reshape(D, 1, 1)      # (D, 1, 1)
    bias = (y1c * b1.astype(jnp.float32).reshape(1, T)
            + y2c * b2.astype(jnp.float32).reshape(D, 1)).reshape(D, T, 1)  # (D, T, 1)

    # Batch-in-lanes layout: (B, D, T) -> (D, T, B) so batch maps to the lane axis.
    # TODO(synk): in a full BiN/C-TABL stack keep activations in (D, T, B) across layers
    #             to avoid these per-call wrapper transposes.
    x_t = jnp.transpose(x, (1, 2, 0))            # streamed in its own dtype (no f32 cast)

    num_tc = _tensorcores_per_chip()
    tb = _pick_batch_tile(B, D, T, num_tc)
    grid = (pl.cdiv(B, tb),)

    block_f32_bytes = D * T * tb * 4
    vmem_limit = int(min(48 << 20, max(32 << 20, 8 * block_f32_bytes)))

    out_t = pl.pallas_call(
        bin_kernel,
        out_shape=jax.ShapeDtypeStruct((D, T, B), out_dtype),
        grid_spec=pltpu.PrefetchScalarGridSpec(
            num_scalar_prefetch=0,
            grid=grid,
            in_specs=[
                pl.BlockSpec((D, T, tb), lambda b: (0, 0, b)),   # x (lane-dense on batch)
                pl.BlockSpec((1, T, 1), lambda b: (0, 0, 0)),    # y1*l1
                pl.BlockSpec((D, 1, 1), lambda b: (0, 0, 0)),    # y2*l2
                pl.BlockSpec((D, T, 1), lambda b: (0, 0, 0)),    # y1*B1 + y2*B2
            ],
            out_specs=pl.BlockSpec((D, T, tb), lambda b: (0, 0, b)),
        ),
        compiler_params=pltpu.CompilerParams(
            dimension_semantics=("parallel",),
            vmem_limit_bytes=vmem_limit,
        ),
    )(x_t, l1_k, l2_k, bias)

    return jnp.transpose(out_t, (2, 0, 1))       # back to (B, D, T)


def reference_forward(x, l1, b1, l2, b2, y1, y2):
    """Pure-JAX reference mirroring the PyTorch forward, for verification."""
    x = x.astype(jnp.float32)
    y1 = jnp.where(y1 < 0, jnp.full_like(y1, 0.01), y1)
    y2 = jnp.where(y2 < 0, jnp.full_like(y2, 0.01), y2)
    mean_t = jnp.mean(x, axis=2, keepdims=True)
    std_t = jnp.std(x, axis=2, keepdims=True, ddof=1)
    std_t = jnp.where(std_t < 1e-4, jnp.ones_like(std_t), std_t)
    Z2 = (x - mean_t) / std_t
    X2 = l2.reshape(1, -1, 1) * Z2 + b2.reshape(1, -1, 1)
    mean_d = jnp.mean(x, axis=1, keepdims=True)
    std_d = jnp.std(x, axis=1, keepdims=True, ddof=1)
    Z1 = (x - mean_d) / std_d
    X1 = l1.reshape(1, 1, -1) * Z1 + b1.reshape(1, 1, -1)
    return y1 * X1 + y2 * X2


if __name__ == "__main__":
    # Small shapes consistent with C-TABL: d1 features, t1 lookback steps, batch B.
    # B is a lane multiple so the kernel's batch-in-lanes blocks are fully lane-dense.
    B, d1, t1 = 256, 16, 10
    key = jax.random.PRNGKey(0)
    kx, kl1, kl2, kb1, kb2 = jax.random.split(key, 5)

    x = jax.random.normal(kx, (B, d1, t1), dtype=jnp.float32)

    # Parameters (xavier-normal scales as in the module __init__; nonzero biases and a
    # negative y1 to exercise the bias path and the y<0 -> 0.01 clamp in forward()).
    l1 = jax.random.normal(kl1, (t1, 1), dtype=jnp.float32) * math.sqrt(2.0 / (t1 + 1))
    l2 = jax.random.normal(kl2, (d1, 1), dtype=jnp.float32) * math.sqrt(2.0 / (d1 + 1))
    B1 = 0.05 * jax.random.normal(kb1, (t1, 1), dtype=jnp.float32)
    B2 = 0.05 * jax.random.normal(kb2, (d1, 1), dtype=jnp.float32)
    y1 = jnp.full((1,), -0.3, dtype=jnp.float32)   # negative -> clamped to 0.01
    y2 = jnp.full((1,), 0.7, dtype=jnp.float32)

    out = bin_forward(x, l1, B1, l2, B2, y1, y2)
    out = jax.block_until_ready(out)

    ref = reference_forward(x, l1, B1, l2, B2, y1, y2)
    assert out.shape == (B, d1, t1)
    assert jnp.allclose(out, ref, atol=3e-5, rtol=3e-5), "mismatch vs reference"

    print("KERNEL_OK")
</pallas_src>

<mosaic_0001>
module attributes {stable_mosaic.version = 11 : i64} {
  func.func @bin_kernel(%arg0: i32, %arg1: memref<16x10x256xf32, #tpu.memory_space<vmem>>, %arg2: memref<1x10x1xf32, #tpu.memory_space<vmem>>, %arg3: memref<16x1x1xf32, #tpu.memory_space<vmem>>, %arg4: memref<16x10x1xf32, #tpu.memory_space<vmem>>, %arg5: memref<16x10x256xf32, #tpu.memory_space<vmem>>) attributes {dimension_semantics = [#tpu.dimension_semantics<parallel>], iteration_bounds = array<i64: 1>, scalar_prefetch = 0 : i64, scratch_operands = 0 : i64, tpu.core_type = #tpu.core_type<tc>, window_params = [{transform_indices = @transform_0, window_bounds = array<i64: 16, 10, 256>}, {pipeline_mode = #tpu.pipeline_mode<synchronous>, transform_indices = @transform_1, window_bounds = array<i64: 1, 10, 1>}, {pipeline_mode = #tpu.pipeline_mode<synchronous>, transform_indices = @transform_2, window_bounds = array<i64: 16, 1, 1>}, {pipeline_mode = #tpu.pipeline_mode<synchronous>, transform_indices = @transform_3, window_bounds = array<i64: 16, 10, 1>}, {transform_indices = @transform_4, window_bounds = array<i64: 16, 10, 256>}]} {
    %c0 = arith.constant 0 : index
    %c0_0 = arith.constant 0 : index
    %c0_1 = arith.constant 0 : index
    %0 = vector.load %arg1[%c0, %c0_0, %c0_1] : memref<16x10x256xf32, #tpu.memory_space<vmem>>, vector<16x10x256xf32>
    %cst = arith.constant dense<0.000000e+00> : vector<16x256xf32>
    %1 = vector.multi_reduction <add>, %0, %cst [1] : vector<16x10x256xf32> to vector<16x256xf32>
    %2 = vector.shape_cast %1 : vector<16x256xf32> to vector<16x1x256xf32>
    %cst_2 = arith.constant 1.000000e+01 : f32
    %3 = vector.broadcast %cst_2 : f32 to vector<16x1x256xf32>
    %4 = arith.divf %2, %3 : vector<16x1x256xf32>
    %5 = vector.broadcast %4 : vector<16x1x256xf32> to vector<16x10x256xf32>
    %6 = arith.subf %0, %5 : vector<16x10x256xf32>
    %7 = arith.mulf %6, %6 : vector<16x10x256xf32>
    %cst_3 = arith.constant dense<0.000000e+00> : vector<16x256xf32>
    %8 = vector.multi_reduction <add>, %7, %cst_3 [1] : vector<16x10x256xf32> to vector<16x256xf32>
    %9 = vector.shape_cast %8 : vector<16x256xf32> to vector<16x1x256xf32>
    %cst_4 = arith.constant 0.111111112 : f32
    %10 = vector.broadcast %cst_4 : f32 to vector<16x1x256xf32>
    %11 = arith.mulf %9, %10 : vector<16x1x256xf32>
    %cst_5 = arith.constant 9.99999993E-9 : f32
    %12 = vector.broadcast %cst_5 : f32 to vector<16x1x256xf32>
    %13 = arith.cmpf olt, %11, %12 : vector<16x1x256xf32>
    %cst_6 = arith.constant 1.000000e+00 : f32
    %14 = vector.broadcast %cst_6 : f32 to vector<16x1x256xf32>
    %15 = math.rsqrt %11 : vector<16x1x256xf32>
    %16 = arith.select %13, %14, %15 : vector<16x1x256xi1>, vector<16x1x256xf32>
    %cst_7 = arith.constant dense<0.000000e+00> : vector<10x256xf32>
    %17 = vector.multi_reduction <add>, %0, %cst_7 [0] : vector<16x10x256xf32> to vector<10x256xf32>
    %18 = vector.shape_cast %17 : vector<10x256xf32> to vector<1x10x256xf32>
    %cst_8 = arith.constant 1.600000e+01 : f32
    %19 = vector.broadcast %cst_8 : f32 to vector<1x10x256xf32>
    %20 = arith.divf %18, %19 : vector<1x10x256xf32>
    %21 = vector.broadcast %20 : vector<1x10x256xf32> to vector<16x10x256xf32>
    %22 = arith.subf %0, %21 : vector<16x10x256xf32>
    %23 = arith.mulf %22, %22 : vector<16x10x256xf32>
    %cst_9 = arith.constant dense<0.000000e+00> : vector<10x256xf32>
    %24 = vector.multi_reduction <add>, %23, %cst_9 [0] : vector<16x10x256xf32> to vector<10x256xf32>
    %25 = vector.shape_cast %24 : vector<10x256xf32> to vector<1x10x256xf32>
    %cst_10 = arith.constant 0.0666666701 : f32
    %26 = vector.broadcast %cst_10 : f32 to vector<1x10x256xf32>
    %27 = arith.mulf %25, %26 : vector<1x10x256xf32>
    %28 = math.rsqrt %27 : vector<1x10x256xf32>
    %c0_11 = arith.constant 0 : index
    %c0_12 = arith.constant 0 : index
    %c0_13 = arith.constant 0 : index
    %29 = vector.load %arg2[%c0_11, %c0_12, %c0_13] : memref<1x10x1xf32, #tpu.memory_space<vmem>>, vector<1x10x1xf32>
    %30 = vector.broadcast %29 : vector<1x10x1xf32> to vector<1x10x256xf32>
    %31 = arith.mulf %30, %28 : vector<1x10x256xf32>
    %c0_14 = arith.constant 0 : index
    %c0_15 = arith.constant 0 : index
    %c0_16 = arith.constant 0 : index
    %32 = vector.load %arg3[%c0_14, %c0_15, %c0_16] : memref<16x1x1xf32, #tpu.memory_space<vmem>>, vector<16x1x1xf32>
    %33 = vector.broadcast %32 : vector<16x1x1xf32> to vector<16x1x256xf32>
    %34 = arith.mulf %33, %16 : vector<16x1x256xf32>
    %35 = vector.broadcast %31 : vector<1x10x256xf32> to vector<16x10x256xf32>
    %36 = arith.mulf %35, %22 : vector<16x10x256xf32>
    %37 = vector.broadcast %34 : vector<16x1x256xf32> to vector<16x10x256xf32>
    %38 = arith.mulf %37, %6 : vector<16x10x256xf32>
    %39 = arith.addf %36, %38 : vector<16x10x256xf32>
    %c0_17 = arith.constant 0 : index
    %c0_18 = arith.constant 0 : index
    %c0_19 = arith.constant 0 : index
    %40 = vector.load %arg4[%c0_17, %c0_18, %c0_19] : memref<16x10x1xf32, #tpu.memory_space<vmem>>, vector<16x10x1xf32>
    %41 = vector.broadcast %40 : vector<16x10x1xf32> to vector<16x10x256xf32>
    %42 = arith.addf %39, %41 : vector<16x10x256xf32>
    %c0_20 = arith.constant 0 : index
    %c0_21 = arith.constant 0 : index
    %c0_22 = arith.constant 0 : index
    %43 = vector.load %arg5[%c0_20, %c0_21, %c0_22] : memref<16x10x256xf32, #tpu.memory_space<vmem>>, vector<16x10x256xf32>
    tpu.vector_store %arg5[%c0_20, %c0_21, %c0_22], %42 {strides = array<i32>} : memref<16x10x256xf32, #tpu.memory_space<vmem>>, vector<16x10x256xf32>,
    return
  }
  func.func @transform_0(%arg0: i32) -> (i32, i32, i32) {
    %c0_i32 = arith.constant 0 : i32
    %c0_i32_0 = arith.constant 0 : i32
    %c0_i32_1 = arith.constant 0 : i32
    return %c0_i32, %c0_i32_0, %arg0 : i32, i32, i32
  }
  func.func @transform_1(%arg0: i32) -> (i32, i32, i32) {
    %c0_i32 = arith.constant 0 : i32
    %c0_i32_0 = arith.constant 0 : i32
    %c0_i32_1 = arith.constant 0 : i32
    %c0_i32_2 = arith.constant 0 : i32
    return %c0_i32, %c0_i32_0, %c0_i32_1 : i32, i32, i32
  }
  func.func @transform_2(%arg0: i32) -> (i32, i32, i32) {
    %c0_i32 = arith.constant 0 : i32
    %c0_i32_0 = arith.constant 0 : i32
    %c0_i32_1 = arith.constant 0 : i32
    %c0_i32_2 = arith.constant 0 : i32
    return %c0_i32, %c0_i32_0, %c0_i32_1 : i32, i32, i32
  }
  func.func @transform_3(%arg0: i32) -> (i32, i32, i32) {
    %c0_i32 = arith.constant 0 : i32
    %c0_i32_0 = arith.constant 0 : i32
    %c0_i32_1 = arith.constant 0 : i32
    %c0_i32_2 = arith.constant 0 : i32
    return %c0_i32, %c0_i32_0, %c0_i32_1 : i32, i32, i32
  }
  func.func @transform_4(%arg0: i32) -> (i32, i32, i32) {
    %c0_i32 = arith.constant 0 : i32
    %c0_i32_0 = arith.constant 0 : i32
    %c0_i32_1 = arith.constant 0 : i32
    return %c0_i32, %c0_i32_0, %arg0 : i32, i32, i32
  }
}

</mosaic_0001>

<llo_original>
// kernel: tpu_custom_call.1
$region0: #{tpu_custom_call.1}
  #allocation0 [shape = 'u32[]', space=smem, size = 0x4, offset = 0x4, fixed_abs, tag = 'smem constant byte address 0x4 - core index']
  #allocation1 [shape = 'u32[72,128]{1,0:T(1,128)}', space=vmem, size = 0x9000, scoped, tag = 'internal scratch']
  %s0 = inlined_call_operand.vmem [shape: f32[16,10,256], index: 0, kind: input, shape index: {}]
  %s1 = inlined_call_operand.vmem [shape: f32[1,10,1], index: 1, kind: input, shape index: {}]
  %s2 = inlined_call_operand.vmem [shape: f32[16,1,1], index: 2, kind: input, shape index: {}]
  %s3 = inlined_call_operand.vmem [shape: f32[16,10,1], index: 3, kind: input, shape index: {}]
  %s4 = inlined_call_operand.vmem [shape: f32[16,10,256], index: 4, kind: output, shape index: {}]
  %s5 = sld [smem:[#allocation0]]
  $region26: #{tpu_custom_call.1} parent=0
    _
  %s7 = ssub.s32 1, %s5
  %s8 = scalar_select 0, %s7, %s5
  // Predicated region
  $region2: #{tpu_custom_call.1} parent=0 // pred_check
    _
  $region3: #{tpu_custom_call.1} parent=0 // pred_check_branch
    %10 = sbr.rel (0) target = $region5
  $region4: #{tpu_custom_call.1} parent=0 // pred_region
    _
  $region5: #{tpu_custom_call.1} parent=0 // pred_fallthru
    _
  // Predicated region
  $region6: #{tpu_custom_call.1} parent=0 // pred_check
    _
  $region7: #{tpu_custom_call.1} parent=0 // pred_check_branch
    %12 = sbr.rel (0) target = $region9
  $region8: #{tpu_custom_call.1} parent=0 // pred_region
    _
  $region9: #{tpu_custom_call.1} parent=0 // pred_fallthru
    _
  // Predicated region
  $region10: #{tpu_custom_call.1} parent=0 // pred_check
    _
  $region11: #{tpu_custom_call.1} parent=0 // pred_check_branch
    %14 = sbr.rel (0) target = $region13
  $region12: #{tpu_custom_call.1} parent=0 // pred_region
    _
  $region13: #{tpu_custom_call.1} parent=0 // pred_fallthru
    _
  // Predicated region
  $region14: #{tpu_custom_call.1} parent=0 // pred_check
    _
  $region15: #{tpu_custom_call.1} parent=0 // pred_check_branch
    %16 = sbr.rel (0) target = $region17
  $region16: #{tpu_custom_call.1} parent=0 // pred_region
    _
  $region17: #{tpu_custom_call.1} parent=0 // pred_fallthru
    _
  %v17 = vld [vmem:[%s0] sm:$0xff]
  %v18 = vld [vmem:[%s0 + $0x8] sm:$0xff]
  %v19 = vld [vmem:[%s0 + $0x10] sm:$0x3]
  %v20 = vld [vmem:[%s0 + $0x18] sm:$0x3]
  %v21 = vld [vmem:[%s0 + $0x20] sm:$0xff]
  %v22 = vld [vmem:[%s0 + $0x28] sm:$0xff]
  %v23 = vld [vmem:[%s0 + $0x30] sm:$0x3]
  %v24 = vld [vmem:[%s0 + $0x38] sm:$0x3]
  %v25 = vld [vmem:[%s0 + $0x40] sm:$0xff]
  %v26 = vld [vmem:[%s0 + $0x48] sm:$0xff]
  %v27 = vld [vmem:[%s0 + $0x50] sm:$0x3]
  %v28 = vld [vmem:[%s0 + $0x58] sm:$0x3]
  %v29 = vld [vmem:[%s0 + $0x60] sm:$0xff]
  %v30 = vld [vmem:[%s0 + $0x68] sm:$0xff]
  %v31 = vld [vmem:[%s0 + $0x70] sm:$0x3]
  %v32 = vld [vmem:[%s0 + $0x78] sm:$0x3]
  %v33 = vld [vmem:[%s0 + $0x80] sm:$0xff]
  %v34 = vld [vmem:[%s0 + $0x88] sm:$0xff]
  %v35 = vld [vmem:[%s0 + $0x90] sm:$0x3]
  %v36 = vld [vmem:[%s0 + $0x98] sm:$0x3]
  %v37 = vld [vmem:[%s0 + $0xa0] sm:$0xff]
  %v38 = vld [vmem:[%s0 + $0xa8] sm:$0xff]
  %v39 = vld [vmem:[%s0 + $0xb0] sm:$0x3]
  %v40 = vld [vmem:[%s0 + $0xb8] sm:$0x3]
  %v41 = vld [vmem:[%s0 + $0xc0] sm:$0xff]
  %v42 = vld [vmem:[%s0 + $0xc8] sm:$0xff]
  %v43 = vld [vmem:[%s0 + $0xd0] sm:$0x3]
  %v44 = vld [vmem:[%s0 + $0xd8] sm:$0x3]
  %v45 = vld [vmem:[%s0 + $0xe0] sm:$0xff]
  %v46 = vld [vmem:[%s0 + $0xe8] sm:$0xff]
  %v47 = vld [vmem:[%s0 + $0xf0] sm:$0x3]
  %v48 = vld [vmem:[%s0 + $0xf8] sm:$0x3]
  %v49 = vld [vmem:[%s0 + $0x100] sm:$0xff]
  %v50 = vld [vmem:[%s0 + $0x108] sm:$0xff]
  %v51 = vld [vmem:[%s0 + $0x110] sm:$0x3]
  %v52 = vld [vmem:[%s0 + $0x118] sm:$0x3]
  %v53 = vld [vmem:[%s0 + $0x120] sm:$0xff]
  %v54 = vld [vmem:[%s0 + $0x128] sm:$0xff]
  %v55 = vld [vmem:[%s0 + $0x130] sm:$0x3]
  %v56 = vld [vmem:[%s0 + $0x138] sm:$0x3]
  %v57 = vld [vmem:[%s0 + $0x140] sm:$0xff]
  %v58 = vld [vmem:[%s0 + $0x148] sm:$0xff]
  %v59 = vld [vmem:[%s0 + $0x150] sm:$0x3]
  %v60 = vld [vmem:[%s0 + $0x158] sm:$0x3]
  %v61 = vld [vmem:[%s0 + $0x160] sm:$0xff]
  %v62 = vld [vmem:[%s0 + $0x168] sm:$0xff]
  %v63 = vld [vmem:[%s0 + $0x170] sm:$0x3]
  %v64 = vld [vmem:[%s0 + $0x178] sm:$0x3]
  %v65 = vld [vmem:[%s0 + $0x180] sm:$0xff]
  %v66 = vld [vmem:[%s0 + $0x188] sm:$0xff]
  %v67 = vld [vmem:[%s0 + $0x190] sm:$0x3]
  %v68 = vld [vmem:[%s0 + $0x198] sm:$0x3]
  %v69 = vld [vmem:[%s0 + $0x1a0] sm:$0xff]
  %v70 = vld [vmem:[%s0 + $0x1a8] sm:$0xff]
  %v71 = vld [vmem:[%s0 + $0x1b0] sm:$0x3]
  %v72 = vld [vmem:[%s0 + $0x1b8] sm:$0x3]
  %v73 = vld [vmem:[%s0 + $0x1c0] sm:$0xff]
  %v74 = vld [vmem:[%s0 + $0x1c8] sm:$0xff]
  %v75 = vld [vmem:[%s0 + $0x1d0] sm:$0x3]
  %v76 = vld [vmem:[%s0 + $0x1d8] sm:$0x3]
  %v77 = vld [vmem:[%s0 + $0x1e0] sm:$0xff]
  %v78 = vld [vmem:[%s0 + $0x1e8] sm:$0xff]
  %v79 = vld [vmem:[%s0 + $0x1f0] sm:$0x3]
  %v80 = vld [vmem:[%s0 + $0x1f8] sm:$0x3]
  %vm81 = vcmask 1041408
  %v82 = vsel %vm81, %v19, 0.0
  %v83 = vadd.f32 %v17, %v82
  %v84 = vrot.slane %v83, 4
  %v85 = vadd.f32 %v83, %v84
  %v86 = vrot.slane %v85, 2
  %v87 = vadd.f32 %v85, %v86
  %v88 = vrot.slane %v87, 1
  %v89 = vadd.f32 %v87, %v88
  %v90 = vsel %vm81, %v20, 0.0
  %v91 = vadd.f32 %v18, %v90
  %v92 = vrot.slane %v91, 4
  %v93 = vadd.f32 %v91, %v92
  %v94 = vrot.slane %v93, 2
  %v95 = vadd.f32 %v93, %v94
  %v96 = vrot.slane %v95, 1
  %v97 = vadd.f32 %v95, %v96
  %v98 = vsel %vm81, %v23, 0.0
  %v99 = vadd.f32 %v21, %v98
  %v100 = vrot.slane %v99, 4
  %v101 = vadd.f32 %v99, %v100
  %v102 = vrot.slane %v101, 2
  %v103 = vadd.f32 %v101, %v102
  %v104 = vrot.slane %v103, 1
  %v105 = vadd.f32 %v103, %v104
  %v106 = vsel %vm81, %v24, 0.0
  %v107 = vadd.f32 %v22, %v106
  %v108 = vrot.slane %v107, 4
  %v109 = vadd.f32 %v107, %v108
  %v110 = vrot.slane %v109, 2
  %v111 = vadd.f32 %v109, %v110
  %v112 = vrot.slane %v111, 1
  %v113 = vadd.f32 %v111, %v112
  %v114 = vsel %vm81, %v27, 0.0
  %v115 = vadd.f32 %v25, %v114
  %v116 = vrot.slane %v115, 4
  %v117 = vadd.f32 %v115, %v116
  %v118 = vrot.slane %v117, 2
  %v119 = vadd.f32 %v117, %v118
  %v120 = vrot.slane %v119, 1
  %v121 = vadd.f32 %v119, %v120
  %v122 = vsel %vm81, %v28, 0.0
  %v123 = vadd.f32 %v26, %v122
  %v124 = vrot.slane %v123, 4
  %v125 = vadd.f32 %v123, %v124
  %v126 = vrot.slane %v125, 2
  %v127 = vadd.f32 %v125, %v126
  %v128 = vrot.slane %v127, 1
  %v129 = vadd.f32 %v127, %v128
  %v130 = vsel %vm81, %v31, 0.0
  %v131 = vadd.f32 %v29, %v130
  %v132 = vrot.slane %v131, 4
  %v133 = vadd.f32 %v131, %v132
  %v134 = vrot.slane %v133, 2
  %v135 = vadd.f32 %v133, %v134
  %v136 = vrot.slane %v135, 1
  %v137 = vadd.f32 %v135, %v136
  %v138 = vsel %vm81, %v32, 0.0
  %v139 = vadd.f32 %v30, %v138
  %v140 = vrot.slane %v139, 4
  %v141 = vadd.f32 %v139, %v140
  %v142 = vrot.slane %v141, 2
  %v143 = vadd.f32 %v141, %v142
  %v144 = vrot.slane %v143, 1
  %v145 = vadd.f32 %v143, %v144
  %v146 = vsel %vm81, %v35, 0.0
  %v147 = vadd.f32 %v33, %v146
  %v148 = vrot.slane %v147, 4
  %v149 = vadd.f32 %v147, %v148
  %v150 = vrot.slane %v149, 2
  %v151 = vadd.f32 %v149, %v150
  %v152 = vrot.slane %v151, 1
  %v153 = vadd.f32 %v151, %v152
  %v154 = vsel %vm81, %v36, 0.0
  %v155 = vadd.f32 %v34, %v154
  %v156 = vrot.slane %v155, 4
  %v157 = vadd.f32 %v155, %v156
  %v158 = vrot.slane %v157, 2
  %v159 = vadd.f32 %v157, %v158
  %v160 = vrot.slane %v159, 1
  %v161 = vadd.f32 %v159, %v160
  %v162 = vsel %vm81, %v39, 0.0
  %v163 = vadd.f32 %v37, %v162
  %v164 = vrot.slane %v163, 4
  %v165 = vadd.f32 %v163, %v164
  %v166 = vrot.slane %v165, 2
  %v167 = vadd.f32 %v165, %v166
  %v168 = vrot.slane %v167, 1
  %v169 = vadd.f32 %v167, %v168
  %v170 = vsel %vm81, %v40, 0.0
  %v171 = vadd.f32 %v38, %v170
  %v172 = vrot.slane %v171, 4
  %v173 = vadd.f32 %v171, %v172
  %v174 = vrot.slane %v173, 2
  %v175 = vadd.f32 %v173, %v174
  %v176 = vrot.slane %v175, 1
  %v177 = vadd.f32 %v175, %v176
  %v178 = vsel %vm81, %v43, 0.0
  %v179 = vadd.f32 %v41, %v178
  %v180 = vrot.slane %v179, 4
  %v181 = vadd.f32 %v179, %v180
  %v182 = vrot.slane %v181, 2
  %v183 = vadd.f32 %v181, %v182
  %v184 = vrot.slane %v183, 1
  %v185 = vadd.f32 %v183, %v184
  %v186 = vsel %vm81, %v44, 0.0
  %v187 = vadd.f32 %v42, %v186
  %v188 = vrot.slane %v187, 4
  %v189 = vadd.f32 %v187, %v188
  %v190 = vrot.slane %v189, 2
  %v191 = vadd.f32 %v189, %v190
  %v192 = vrot.slane %v191, 1
  %v193 = vadd.f32 %v191, %v192
  %v194 = vsel %vm81, %v47, 0.0
  %v195 = vadd.f32 %v45, %v194
  %v196 = vrot.slane %v195, 4
  %v197 = vadd.f32 %v195, %v196
  %v198 = vrot.slane %v197, 2
  %v199 = vadd.f32 %v197, %v198
  %v200 = vrot.slane %v199, 1
  %v201 = vadd.f32 %v199, %v200
  %v202 = vsel %vm81, %v48, 0.0
  %v203 = vadd.f32 %v46, %v202
  %v204 = vrot.slane %v203, 4
  %v205 = vadd.f32 %v203, %v204
  %v206 = vrot.slane %v205, 2
  %v207 = vadd.f32 %v205, %v206
  %v208 = vrot.slane %v207, 1
  %v209 = vadd.f32 %v207, %v208
  %v210 = vsel %vm81, %v51, 0.0
  %v211 = vadd.f32 %v49, %v210
  %v212 = vrot.slane %v211, 4
  %v213 = vadd.f32 %v211, %v212
  %v214 = vrot.slane %v213, 2
  %v215 = vadd.f32 %v213, %v214
  %v216 = vrot.slane %v215, 1
  %v217 = vadd.f32 %v215, %v216
  %v218 = vsel %vm81, %v52, 0.0
  %v219 = vadd.f32 %v50, %v218
  %v220 = vrot.slane %v219, 4
  %v221 = vadd.f32 %v219, %v220
  %v222 = vrot.slane %v221, 2
  %v223 = vadd.f32 %v221, %v222
  %v224 = vrot.slane %v223, 1
  %v225 = vadd.f32 %v223, %v224
  %v226 = vsel %vm81, %v55, 0.0
  %v227 = vadd.f32 %v53, %v226
  %v228 = vrot.slane %v227, 4
  %v229 = vadd.f32 %v227, %v228
  %v230 = vrot.slane %v229, 2
  %v231 = vadd.f32 %v229, %v230
  %v232 = vrot.slane %v231, 1
  %v233 = vadd.f32 %v231, %v232
  %v234 = vsel %vm81, %v56, 0.0
  %v235 = vadd.f32 %v54, %v234
  %v236 = vrot.slane %v235, 4
  %v237 = vadd.f32 %v235, %v236
  %v238 = vrot.slane %v237, 2
  %v239 = vadd.f32 %v237, %v238
  %v240 = vrot.slane %v239, 1
  %v241 = vadd.f32 %v239, %v240
  %v242 = vsel %vm81, %v59, 0.0
  %v243 = vadd.f32 %v57, %v242
  %v244 = vrot.slane %v243, 4
  %v245 = vadd.f32 %v243, %v244
  %v246 = vrot.slane %v245, 2
  %v247 = vadd.f32 %v245, %v246
  %v248 = vrot.slane %v247, 1
  %v249 = vadd.f32 %v247, %v248
  %v250 = vsel %vm81, %v60, 0.0
  %v251 = vadd.f32 %v58, %v250
  %v252 = vrot.slane %v251, 4
  %v253 = vadd.f32 %v251, %v252
  %v254 = vrot.slane %v253, 2
  %v255 = vadd.f32 %v253, %v254
  %v256 = vrot.slane %v255, 1
  %v257 = vadd.f32 %v255, %v256
  %v258 = vsel %vm81, %v63, 0.0
  %v259 = vadd.f32 %v61, %v258
  %v260 = vrot.slane %v259, 4
  %v261 = vadd.f32 %v259, %v260
  %v262 = vrot.slane %v261, 2
  %v263 = vadd.f32 %v261, %v262
  %v264 = vrot.slane %v263, 1
  %v265 = vadd.f32 %v263, %v264
  %v266 = vsel %vm81, %v64, 0.0
  %v267 = vadd.f32 %v62, %v266
  %v268 = vrot.slane %v267, 4
  %v269 = vadd.f32 %v267, %v268
  %v270 = vrot.slane %v269, 2
  %v271 = vadd.f32 %v269, %v270
  %v272 = vrot.slane %v271, 1
  %v273 = vadd.f32 %v271, %v272
  %v274 = vsel %vm81, %v67, 0.0
  %v275 = vadd.f32 %v65, %v274
  %v276 = vrot.slane %v275, 4
  %v277 = vadd.f32 %v275, %v276
  %v278 = vrot.slane %v277, 2
  %v279 = vadd.f32 %v277, %v278
  %v280 = vrot.slane %v279, 1
  %v281 = vadd.f32 %v279, %v280
  %v282 = vsel %vm81, %v68, 0.0
  %v283 = vadd.f32 %v66, %v282
  %v284 = vrot.slane %v283, 4
  %v285 = vadd.f32 %v283, %v284
  %v286 = vrot.slane %v285, 2
  %v287 = vadd.f32 %v285, %v286
  %v288 = vrot.slane %v287, 1
  %v289 = vadd.f32 %v287, %v288
  %v290 = vsel %vm81, %v71, 0.0
  %v291 = vadd.f32 %v69, %v290
  %v292 = vrot.slane %v291, 4
  %v293 = vadd.f32 %v291, %v292
  %v294 = vrot.slane %v293, 2
  %v295 = vadd.f32 %v293, %v294
  %v296 = vrot.slane %v295, 1
  %v297 = vadd.f32 %v295, %v296
  %v298 = vsel %vm81, %v72, 0.0
  %v299 = vadd.f32 %v70, %v298
  %v300 = vrot.slane %v299, 4
  %v301 = vadd.f32 %v299, %v300
  %v302 = vrot.slane %v301, 2
  %v303 = vadd.f32 %v301, %v302
  %v304 = vrot.slane %v303, 1
  %v305 = vadd.f32 %v303, %v304
  %v306 = vsel %vm81, %v75, 0.0
  %v307 = vadd.f32 %v73, %v306
  %v308 = vrot.slane %v307, 4
  %v309 = vadd.f32 %v307, %v308
  %v310 = vrot.slane %v309, 2
  %v311 = vadd.f32 %v309, %v310
  %v312 = vrot.slane %v311, 1
  %v313 = vadd.f32 %v311, %v312
  %v314 = vsel %vm81, %v76, 0.0
  %v315 = vadd.f32 %v74, %v314
  %v316 = vrot.slane %v315, 4
  %v317 = vadd.f32 %v315, %v316
  %v318 = vrot.slane %v317, 2
  %v319 = vadd.f32 %v317, %v318
  %v320 = vrot.slane %v319, 1
  %v321 = vadd.f32 %v319, %v320
  %v322 = vsel %vm81, %v79, 0.0
  %v323 = vadd.f32 %v77, %v322
  %v324 = vrot.slane %v323, 4
  %v325 = vadd.f32 %v323, %v324
  %v326 = vrot.slane %v325, 2
  %v327 = vadd.f32 %v325, %v326
  %v328 = vrot.slane %v327, 1
  %v329 = vadd.f32 %v327, %v328
  %v330 = vsel %vm81, %v80, 0.0
  %v331 = vadd.f32 %v78, %v330
  %v332 = vrot.slane %v331, 4
  %v333 = vadd.f32 %v331, %v332
  %v334 = vrot.slane %v333, 2
  %v335 = vadd.f32 %v333, %v334
  %v336 = vrot.slane %v335, 1
  %v337 = vadd.f32 %v335, %v336
  %v338 = vrcp.pop 10.0
  %v339 = vmul.f32 10.0, %v338
  %v340 = vsub.f32 1.0, %v339
  %v341 = vmul.f32 %v338, %v340
  %v342 = vadd.f32 %v338, %v341
  %vm343 = vweird.f32 %v338
  %v344 = vsel %vm343, %v338, %v342
  %v345 = vmul.f32 %v89, %v344
  %v346 = vmul.f32 %v97, %v344
  %v347 = vmul.f32 %v105, %v344
  %v348 = vmul.f32 %v113, %v344
  %v349 = vmul.f32 %v121, %v344
  %v350 = vmul.f32 %v129, %v344
  %v351 = vmul.f32 %v137, %v344
  %v352 = vmul.f32 %v145, %v344
  %v353 = vmul.f32 %v153, %v344
  %v354 = vmul.f32 %v161, %v344
  %v355 = vmul.f32 %v169, %v344
  %v356 = vmul.f32 %v177, %v344
  %v357 = vmul.f32 %v185, %v344
  %v358 = vmul.f32 %v193, %v344
  %v359 = vmul.f32 %v201, %v344
  %v360 = vmul.f32 %v209, %v344
  %v361 = vmul.f32 %v217, %v344
  %v362 = vmul.f32 %v225, %v344
  %v363 = vmul.f32 %v233, %v344
  %v364 = vmul.f32 %v241, %v344
  %v365 = vmul.f32 %v249, %v344
  %v366 = vmul.f32 %v257, %v344
  %v367 = vmul.f32 %v265, %v344
  %v368 = vmul.f32 %v273, %v344
  %v369 = vmul.f32 %v281, %v344
  %v370 = vmul.f32 %v289, %v344
  %v371 = vmul.f32 %v297, %v344
  %v372 = vmul.f32 %v305, %v344
  %v373 = vmul.f32 %v313, %v344
  %v374 = vmul.f32 %v321, %v344
  %v375 = vmul.f32 %v329, %v344
  %v376 = vmul.f32 %v337, %v344
  %v377 = vsub.f32 %v17, %v345
  %v378 = vsub.f32 %v18, %v346
  %v379 = vsub.f32 %v19, %v345
  %v380 = vsub.f32 %v20, %v346
  %v381 = vsub.f32 %v21, %v347
  %v382 = vsub.f32 %v22, %v348
  %v383 = vsub.f32 %v23, %v347
  %v384 = vsub.f32 %v24, %v348
  %v385 = vsub.f32 %v25, %v349
  %v386 = vsub.f32 %v26, %v350
  %v387 = vsub.f32 %v27, %v349
  %v388 = vsub.f32 %v28, %v350
  %v389 = vsub.f32 %v29, %v351
  %v390 = vsub.f32 %v30, %v352
  %v391 = vsub.f32 %v31, %v351
  %v392 = vsub.f32 %v32, %v352
  %v393 = vsub.f32 %v33, %v353
  %v394 = vsub.f32 %v34, %v354
  %v395 = vsub.f32 %v35, %v353
  %v396 = vsub.f32 %v36, %v354
  %v397 = vsub.f32 %v37, %v355
  %v398 = vsub.f32 %v38, %v356
  %v399 = vsub.f32 %v39, %v355
  %v400 = vsub.f32 %v40, %v356
  %v401 = vsub.f32 %v41, %v357
  %v402 = vsub.f32 %v42, %v358
  %v403 = vsub.f32 %v43, %v357
  %v404 = vsub.f32 %v44, %v358
  %v405 = vsub.f32 %v45, %v359
  %v406 = vsub.f32 %v46, %v360
  %v407 = vsub.f32 %v47, %v359
  %v408 = vsub.f32 %v48, %v360
  %v409 = vsub.f32 %v49, %v361
  %v410 = vsub.f32 %v50, %v362
  %v411 = vsub.f32 %v51, %v361
  %v412 = vsub.f32 %v52, %v362
  %v413 = vsub.f32 %v53, %v363
  %v414 = vsub.f32 %v54, %v364
  %v415 = vsub.f32 %v55, %v363
  %v416 = vsub.f32 %v56, %v364
  %v417 = vsub.f32 %v57, %v365
  %v418 = vsub.f32 %v58, %v366
  %v419 = vsub.f32 %v59, %v365
  %v420 = vsub.f32 %v60, %v366
  %v421 = vsub.f32 %v61, %v367
  %v422 = vsub.f32 %v62, %v368
  %v423 = vsub.f32 %v63, %v367
  %v424 = vsub.f32 %v64, %v368
  %v425 = vsub.f32 %v65, %v369
  %v426 = vsub.f32 %v66, %v370
  %v427 = vsub.f32 %v67, %v369
  %v428 = vsub.f32 %v68, %v370
  %v429 = vsub.f32 %v69, %v371
  %v430 = vsub.f32 %v70, %v372
  %v431 = vsub.f32 %v71, %v371
  %v432 = vsub.f32 %v72, %v372
  %v433 = vsub.f32 %v73, %v373
  %v434 = vsub.f32 %v74, %v374
  %v435 = vsub.f32 %v75, %v373
  %v436 = vsub.f32 %v76, %v374
  %v437 = vsub.f32 %v77, %v375
  %v438 = vsub.f32 %v78, %v376
  %v439 = vsub.f32 %v79, %v375
  %v440 = vsub.f32 %v80, %v376
  %v441 = vmul.f32 %v377, %v377
  %v442 = vmul.f32 %v378, %v378
  %v443 = vmul.f32 %v379, %v379
  %v444 = vmul.f32 %v380, %v380
  %v445 = vmul.f32 %v381, %v381
  %v446 = vmul.f32 %v382, %v382
  %v447 = vmul.f32 %v383, %v383
  %v448 = vmul.f32 %v384, %v384
  %v449 = vmul.f32 %v385, %v385
  %v450 = vmul.f32 %v386, %v386
  %v451 = vmul.f32 %v387, %v387
  %v452 = vmul.f32 %v388, %v388
  %v453 = vmul.f32 %v389, %v389
  %v454 = vmul.f32 %v390, %v390
  %v455 = vmul.f32 %v391, %v391
  %v456 = vmul.f32 %v392, %v392
  %v457 = vmul.f32 %v393, %v393
  %v458 = vmul.f32 %v394, %v394
  %v459 = vmul.f32 %v395, %v395
  %v460 = vmul.f32 %v396, %v396
  %v461 = vmul.f32 %v397, %v397
  %v462 = vmul.f32 %v398, %v398
  %v463 = vmul.f32 %v399, %v399
  %v464 = vmul.f32 %v400, %v400
  %v465 = vmul.f32 %v401, %v401
  %v466 = vmul.f32 %v402, %v402
  %v467 = vmul.f32 %v403, %v403
  %v468 = vmul.f32 %v404, %v404
  %v469 = vmul.f32 %v405, %v405
  %v470 = vmul.f32 %v406, %v406
  %v471 = vmul.f32 %v407, %v407
  %v472 = vmul.f32 %v408, %v408
  %v473 = vmul.f32 %v409, %v409
  %v474 = vmul.f32 %v410, %v410
  %v475 = vmul.f32 %v411, %v411
  %v476 = vmul.f32 %v412, %v412
  %v477 = vmul.f32 %v413, %v413
  %v478 = vmul.f32 %v414, %v414
  %v479 = vmul.f32 %v415, %v415
  %v480 = vmul.f32 %v416, %v416
  %v481 = vmul.f32 %v417, %v417
  %v482 = vmul.f32 %v418, %v418
  %v483 = vmul.f32 %v419, %v419
  %v484 = vmul.f32 %v420, %v420
  %v485 = vmul.f32 %v421, %v421
  %v486 = vmul.f32 %v422, %v422
  %v487 = vmul.f32 %v423, %v423
  %v488 = vmul.f32 %v424, %v424
  %v489 = vmul.f32 %v425, %v425
  %v490 = vmul.f32 %v426, %v426
  %v491 = vmul.f32 %v427, %v427
  %v492 = vmul.f32 %v428, %v428
  %v493 = vmul.f32 %v429, %v429
  %v494 = vmul.f32 %v430, %v430
  %v495 = vmul.f32 %v431, %v431
  %v496 = vmul.f32 %v432, %v432
  %v497 = vmul.f32 %v433, %v433
  %v498 = vmul.f32 %v434, %v434
  %v499 = vmul.f32 %v435, %v435
  %v500 = vmul.f32 %v436, %v436
  %v501 = vmul.f32 %v437, %v437
  %v502 = vmul.f32 %v438, %v438
  %v503 = vmul.f32 %v439, %v439
  %v504 = vmul.f32 %v440, %v440
  %v505 = vsel %vm81, %v443, 0.0
  %v506 = vadd.f32 %v441, %v505
  %v507 = vrot.slane %v506, 4
  %v508 = vadd.f32 %v506, %v507
  %v509 = vrot.slane %v508, 2
  %v510 = vadd.f32 %v508, %v509
  %v511 = vrot.slane %v510, 1
  %v512 = vadd.f32 %v510, %v511
  %v513 = vsel %vm81, %v444, 0.0
  %v514 = vadd.f32 %v442, %v513
  %v515 = vrot.slane %v514, 4
  %v516 = vadd.f32 %v514, %v515
  %v517 = vrot.slane %v516, 2
  %v518 = vadd.f32 %v516, %v517
  %v519 = vrot.slane %v518, 1
  %v520 = vadd.f32 %v518, %v519
  %v521 = vsel %vm81, %v447, 0.0
  %v522 = vadd.f32 %v445, %v521
  %v523 = vrot.slane %v522, 4
  %v524 = vadd.f32 %v522, %v523
  %v525 = vrot.slane %v524, 2
  %v526 = vadd.f32 %v524, %v525
  %v527 = vrot.slane %v526, 1
  %v528 = vadd.f32 %v526, %v527
  %v529 = vsel %vm81, %v448, 0.0
  %v530 = vadd.f32 %v446, %v529
  %v531 = vrot.slane %v530, 4
  %v532 = vadd.f32 %v530, %v531
  %v533 = vrot.slane %v532, 2
  %v534 = vadd.f32 %v532, %v533
  %v535 = vrot.slane %v534, 1
  %v536 = vadd.f32 %v534, %v535
  %v537 = vsel %vm81, %v451, 0.0
  %v538 = vadd.f32 %v449, %v537
  %v539 = vrot.slane %v538, 4
  %v540 = vadd.f32 %v538, %v539
  %v541 = vrot.slane %v540, 2
  %v542 = vadd.f32 %v540, %v541
  %v543 = vrot.slane %v542, 1
  %v544 = vadd.f32 %v542, %v543
  %v545 = vsel %vm81, %v452, 0.0
  %v546 = vadd.f32 %v450, %v545
  %v547 = vrot.slane %v546, 4
  %v548 = vadd.f32 %v546, %v547
  %v549 = vrot.slane %v548, 2
  %v550 = vadd.f32 %v548, %v549
  %v551 = vrot.slane %v550, 1
  %v552 = vadd.f32 %v550, %v551
  %v553 = vsel %vm81, %v455, 0.0
  %v554 = vadd.f32 %v453, %v553
  %v555 = vrot.slane %v554, 4
  %v556 = vadd.f32 %v554, %v555
  %v557 = vrot.slane %v556, 2
  %v558 = vadd.f32 %v556, %v557
  %v559 = vrot.slane %v558, 1
  %v560 = vadd.f32 %v558, %v559
  %v561 = vsel %vm81, %v456, 0.0
  %v562 = vadd.f32 %v454, %v561
  %v563 = vrot.slane %v562, 4
  %v564 = vadd.f32 %v562, %v563
  %v565 = vrot.slane %v564, 2
  %v566 = vadd.f32 %v564, %v565
  %v567 = vrot.slane %v566, 1
  %v568 = vadd.f32 %v566, %v567
  %v569 = vsel %vm81, %v459, 0.0
  %v570 = vadd.f32 %v457, %v569
  %v571 = vrot.slane %v570, 4
  %v572 = vadd.f32 %v570, %v571
  %v573 = vrot.slane %v572, 2
  %v574 = vadd.f32 %v572, %v573
  %v575 = vrot.slane %v574, 1
  %v576 = vadd.f32 %v574, %v575
  %v577 = vsel %vm81, %v460, 0.0
  %v578 = vadd.f32 %v458, %v577
  %v579 = vrot.slane %v578, 4
  %v580 = vadd.f32 %v578, %v579
  %v581 = vrot.slane %v580, 2
  %v582 = vadd.f32 %v580, %v581
  %v583 = vrot.slane %v582, 1
  %v584 = vadd.f32 %v582, %v583
  %v585 = vsel %vm81, %v463, 0.0
  %v586 = vadd.f32 %v461, %v585
  %v587 = vrot.slane %v586, 4
  %v588 = vadd.f32 %v586, %v587
  %v589 = vrot.slane %v588, 2
  %v590 = vadd.f32 %v588, %v589
  %v591 = vrot.slane %v590, 1
  %v592 = vadd.f32 %v590, %v591
  %v593 = vsel %vm81, %v464, 0.0
  %v594 = vadd.f32 %v462, %v593
  %v595 = vrot.slane %v594, 4
  %v596 = vadd.f32 %v594, %v595
  %v597 = vrot.slane %v596, 2
  %v598 = vadd.f32 %v596, %v597
  %v599 = vrot.slane %v598, 1
  %v600 = vadd.f32 %v598, %v599
  %v601 = vsel %vm81, %v467, 0.0
  %v602 = vadd.f32 %v465, %v601
  %v603 = vrot.slane %v602, 4
  %v604 = vadd.f32 %v602, %v603
  %v605 = vrot.slane %v604, 2
  %v606 = vadd.f32 %v604, %v605
  %v607 = vrot.slane %v606, 1
  %v608 = vadd.f32 %v606, %v607
  %v609 = vsel %vm81, %v468, 0.0
  %v610 = vadd.f32 %v466, %v609
  %v611 = vrot.slane %v610, 4
  %v612 = vadd.f32 %v610, %v611
  %v613 = vrot.slane %v612, 2
  %v614 = vadd.f32 %v612, %v613
  %v615 = vrot.slane %v614, 1
  %v616 = vadd.f32 %v614, %v615
  %v617 = vsel %vm81, %v471, 0.0
  %v618 = vadd.f32 %v469, %v617
  %v619 = vrot.slane %v618, 4
  %v620 = vadd.f32 %v618, %v619
  %v621 = vrot.slane %v620, 2
  %v622 = vadd.f32 %v620, %v621
  %v623 = vrot.slane %v622, 1
  %v624 = vadd.f32 %v622, %v623
  %v625 = vsel %vm81, %v472, 0.0
  %v626 = vadd.f32 %v470, %v625
  %v627 = vrot.slane %v626, 4
  %v628 = vadd.f32 %v626, %v627
  %v629 = vrot.slane %v628, 2
  %v630 = vadd.f32 %v628, %v629
  %v631 = vrot.slane %v630, 1
  %v632 = vadd.f32 %v630, %v631
  %v633 = vsel %vm81, %v475, 0.0
  %v634 = vadd.f32 %v473, %v633
  %v635 = vrot.slane %v634, 4
  %v636 = vadd.f32 %v634, %v635
  %v637 = vrot.slane %v636, 2
  %v638 = vadd.f32 %v636, %v637
  %v639 = vrot.slane %v638, 1
  %v640 = vadd.f32 %v638, %v639
  %v641 = vsel %vm81, %v476, 0.0
  %v642 = vadd.f32 %v474, %v641
  %v643 = vrot.slane %v642, 4
  %v644 = vadd.f32 %v642, %v643
  %v645 = vrot.slane %v644, 2
  %v646 = vadd.f32 %v644, %v645
  %v647 = vrot.slane %v646, 1
  %v648 = vadd.f32 %v646, %v647
  %v649 = vsel %vm81, %v479, 0.0
  %v650 = vadd.f32 %v477, %v649
  %v651 = vrot.slane %v650, 4
  %v652 = vadd.f32 %v650, %v651
  %v653 = vrot.slane %v652, 2
  %v654 = vadd.f32 %v652, %v653
  %v655 = vrot.slane %v654, 1
  %v656 = vadd.f32 %v654, %v655
  %v657 = vsel %vm81, %v480, 0.0
  %v658 = vadd.f32 %v478, %v657
  %v659 = vrot.slane %v658, 4
  %v660 = vadd.f32 %v658, %v659
  %v661 = vrot.slane %v660, 2
  %v662 = vadd.f32 %v660, %v661
  %v663 = vrot.slane %v662, 1
  %v664 = vadd.f32 %v662, %v663
  %v665 = vsel %vm81, %v483, 0.0
  %v666 = vadd.f32 %v481, %v665
  %v667 = vrot.slane %v666, 4
  %v668 = vadd.f32 %v666, %v667
  %v669 = vrot.slane %v668, 2
  %v670 = vadd.f32 %v668, %v669
  %v671 = vrot.slane %v670, 1
  %v672 = vadd.f32 %v670, %v671
  %v673 = vsel %vm81, %v484, 0.0
  %v674 = vadd.f32 %v482, %v673
  %v675 = vrot.slane %v674, 4
  %v676 = vadd.f32 %v674, %v675
  %v677 = vrot.slane %v676, 2
  %v678 = vadd.f32 %v676, %v677
  %v679 = vrot.slane %v678, 1
  %v680 = vadd.f32 %v678, %v679
  %v681 = vsel %vm81, %v487, 0.0
  %v682 = vadd.f32 %v485, %v681
  %v683 = vrot.slane %v682, 4
  %v684 = vadd.f32 %v682, %v683
  %v685 = vrot.slane %v684, 2
  %v686 = vadd.f32 %v684, %v685
  %v687 = vrot.slane %v686, 1
  %v688 = vadd.f32 %v686, %v687
  %v689 = vsel %vm81, %v488, 0.0
  %v690 = vadd.f32 %v486, %v689
  %v691 = vrot.slane %v690, 4
  %v692 = vadd.f32 %v690, %v691
  %v693 = vrot.slane %v692, 2
  %v694 = vadd.f32 %v692, %v693
  %v695 = vrot.slane %v694, 1
  %v696 = vadd.f32 %v694, %v695
  %v697 = vsel %vm81, %v491, 0.0
  %v698 = vadd.f32 %v489, %v697
  %v699 = vrot.slane %v698, 4
  %v700 = vadd.f32 %v698, %v699
  %v701 = vrot.slane %v700, 2
  %v702 = vadd.f32 %v700, %v701
  %v703 = vrot.slane %v702, 1
  %v704 = vadd.f32 %v702, %v703
  %v705 = vsel %vm81, %v492, 0.0
  %v706 = vadd.f32 %v490, %v705
  %v707 = vrot.slane %v706, 4
  %v708 = vadd.f32 %v706, %v707
  %v709 = vrot.slane %v708, 2
  %v710 = vadd.f32 %v708, %v709
  %v711 = vrot.slane %v710, 1
  %v712 = vadd.f32 %v710, %v711
  %v713 = vsel %vm81, %v495, 0.0
  %v714 = vadd.f32 %v493, %v713
  %v715 = vrot.slane %v714, 4
  %v716 = vadd.f32 %v714, %v715
  %v717 = vrot.slane %v716, 2
  %v718 = vadd.f32 %v716, %v717
  %v719 = vrot.slane %v718, 1
  %v720 = vadd.f32 %v718, %v719
  %v721 = vsel %vm81, %v496, 0.0
  %v722 = vadd.f32 %v494, %v721
  %v723 = vrot.slane %v722, 4
  %v724 = vadd.f32 %v722, %v723
  %v725 = vrot.slane %v724, 2
  %v726 = vadd.f32 %v724, %v725
  %v727 = vrot.slane %v726, 1
  %v728 = vadd.f32 %v726, %v727
  %v729 = vsel %vm81, %v499, 0.0
  %v730 = vadd.f32 %v497, %v729
  %v731 = vrot.slane %v730, 4
  %v732 = vadd.f32 %v730, %v731
  %v733 = vrot.slane %v732, 2
  %v734 = vadd.f32 %v732, %v733
  %v735 = vrot.slane %v734, 1
  %v736 = vadd.f32 %v734, %v735
  %v737 = vsel %vm81, %v500, 0.0
  %v738 = vadd.f32 %v498, %v737
  %v739 = vrot.slane %v738, 4
  %v740 = vadd.f32 %v738, %v739
  %v741 = vrot.slane %v740, 2
  %v742 = vadd.f32 %v740, %v741
  %v743 = vrot.slane %v742, 1
  %v744 = vadd.f32 %v742, %v743
  %v745 = vsel %vm81, %v503, 0.0
  %v746 = vadd.f32 %v501, %v745
  %v747 = vrot.slane %v746, 4
  %v748 = vadd.f32 %v746, %v747
  %v749 = vrot.slane %v748, 2
  %v750 = vadd.f32 %v748, %v749
  %v751 = vrot.slane %v750, 1
  %v752 = vadd.f32 %v750, %v751
  %v753 = vsel %vm81, %v504, 0.0
  %v754 = vadd.f32 %v502, %v753
  %v755 = vrot.slane %v754, 4
  %v756 = vadd.f32 %v754, %v755
  %v757 = vrot.slane %v756, 2
  %v758 = vadd.f32 %v756, %v757
  %v759 = vrot.slane %v758, 1
  %v760 = vadd.f32 %v758, %v759
  %v761 = vmul.f32 %v512, 0.11111111
  %v762 = vmul.f32 %v520, 0.11111111
  %v763 = vmul.f32 %v528, 0.11111111
  %v764 = vmul.f32 %v536, 0.11111111
  %v765 = vmul.f32 %v544, 0.11111111
  %v766 = vmul.f32 %v552, 0.11111111
  %v767 = vmul.f32 %v560, 0.11111111
  %v768 = vmul.f32 %v568, 0.11111111
  %v769 = vmul.f32 %v576, 0.11111111
  %v770 = vmul.f32 %v584, 0.11111111
  %v771 = vmul.f32 %v592, 0.11111111
  %v772 = vmul.f32 %v600, 0.11111111
  %v773 = vmul.f32 %v608, 0.11111111
  %v774 = vmul.f32 %v616, 0.11111111
  %v775 = vmul.f32 %v624, 0.11111111
  %v776 = vmul.f32 %v632, 0.11111111
  %v777 = vmul.f32 %v640, 0.11111111
  %v778 = vmul.f32 %v648, 0.11111111
  %v779 = vmul.f32 %v656, 0.11111111
  %v780 = vmul.f32 %v664, 0.11111111
  %v781 = vmul.f32 %v672, 0.11111111
  %v782 = vmul.f32 %v680, 0.11111111
  %v783 = vmul.f32 %v688, 0.11111111
  %v784 = vmul.f32 %v696, 0.11111111
  %v785 = vmul.f32 %v704, 0.11111111
  %v786 = vmul.f32 %v712, 0.11111111
  %v787 = vmul.f32 %v720, 0.11111111
  %v788 = vmul.f32 %v728, 0.11111111
  %v789 = vmul.f32 %v736, 0.11111111
  %v790 = vmul.f32 %v744, 0.11111111
  %v791 = vmul.f32 %v752, 0.11111111
  %v792 = vmul.f32 %v760, 0.11111111
  %vm793 = vcmp.lt.f32.partialorder %v761, 1e-08
  %vm794 = vcmp.lt.f32.partialorder %v762, 1e-08
  %vm795 = vcmp.lt.f32.partialorder %v763, 1e-08
  %vm796 = vcmp.lt.f32.partialorder %v764, 1e-08
  %vm797 = vcmp.lt.f32.partialorder %v765, 1e-08
  %vm798 = vcmp.lt.f32.partialorder %v766, 1e-08
  %vm799 = vcmp.lt.f32.partialorder %v767, 1e-08
  %vm800 = vcmp.lt.f32.partialorder %v768, 1e-08
  %vm801 = vcmp.lt.f32.partialorder %v769, 1e-08
  %vm802 = vcmp.lt.f32.partialorder %v770, 1e-08
  %vm803 = vcmp.lt.f32.partialorder %v771, 1e-08
  %vm804 = vcmp.lt.f32.partialorder %v772, 1e-08
  %vm805 = vcmp.lt.f32.partialorder %v773, 1e-08
  %vm806 = vcmp.lt.f32.partialorder %v774, 1e-08
  %vm807 = vcmp.lt.f32.partialorder %v775, 1e-08
  %vm808 = vcmp.lt.f32.partialorder %v776, 1e-08
  %vm809 = vcmp.lt.f32.partialorder %v777, 1e-08
  %vm810 = vcmp.lt.f32.partialorder %v778, 1e-08
  %vm811 = vcmp.lt.f32.partialorder %v779, 1e-08
  %vm812 = vcmp.lt.f32.partialorder %v780, 1e-08
  %vm813 = vcmp.lt.f32.partialorder %v781, 1e-08
  %vm814 = vcmp.lt.f32.partialorder %v782, 1e-08
  %vm815 = vcmp.lt.f32.partialorder %v783, 1e-08
  %vm816 = vcmp.lt.f32.partialorder %v784, 1e-08
  %vm817 = vcmp.lt.f32.partialorder %v785, 1e-08
  %vm818 = vcmp.lt.f32.partialorder %v786, 1e-08
  %vm819 = vcmp.lt.f32.partialorder %v787, 1e-08
  %vm820 = vcmp.lt.f32.partialorder %v788, 1e-08
  %vm821 = vcmp.lt.f32.partialorder %v789, 1e-08
  %vm822 = vcmp.lt.f32.partialorder %v790, 1e-08
  %vm823 = vcmp.lt.f32.partialorder %v791, 1e-08
  %vm824 = vcmp.lt.f32.partialorder %v792, 1e-08
  %v825 = vrsqrt.pop %v761
  %v826 = vmul.f32 %v825, %v761
  %v827 = vmul.f32 %v826, %v825
  %v828 = vmul.f32 0.5, %v827
  %v829 = vsub.f32 1.5, %v828
  %v830 = vmul.f32 %v825, %v829
  %vm831 = vweird.f32 %v761
  %vm832 = vweird.f32 %v825
  %vm833 = vmor %vm831, %vm832
  %v834 = vsel %vm833, %v825, %v830
  %v835 = vrsqrt.pop %v762
  %v836 = vmul.f32 %v835, %v762
  %v837 = vmul.f32 %v836, %v835
  %v838 = vmul.f32 0.5, %v837
  %v839 = vsub.f32 1.5, %v838
  %v840 = vmul.f32 %v835, %v839
  %vm841 = vweird.f32 %v762
  %vm842 = vweird.f32 %v835
  %vm843 = vmor %vm841, %vm842
  %v844 = vsel %vm843, %v835, %v840
  %v845 = vrsqrt.pop %v763
  %v846 = vmul.f32 %v845, %v763
  %v847 = vmul.f32 %v846, %v845
  %v848 = vmul.f32 0.5, %v847
  %v849 = vsub.f32 1.5, %v848
  %v850 = vmul.f32 %v845, %v849
  %vm851 = vweird.f32 %v763
  %vm852 = vweird.f32 %v845
  %vm853 = vmor %vm851, %vm852
  %v854 = vsel %vm853, %v845, %v850
  %v855 = vrsqrt.pop %v764
  %v856 = vmul.f32 %v855, %v764
  %v857 = vmul.f32 %v856, %v855
  %v858 = vmul.f32 0.5, %v857
  %v859 = vsub.f32 1.5, %v858
  %v860 = vmul.f32 %v855, %v859
  %vm861 = vweird.f32 %v764
  %vm862 = vweird.f32 %v855
  %vm863 = vmor %vm861, %vm862
  %v864 = vsel %vm863, %v855, %v860
  %v865 = vrsqrt.pop %v765
  %v866 = vmul.f32 %v865, %v765
  %v867 = vmul.f32 %v866, %v865
  %v868 = vmul.f32 0.5, %v867
  %v869 = vsub.f32 1.5, %v868
  %v870 = vmul.f32 %v865, %v869
  %vm871 = vweird.f32 %v765
  %vm872 = vweird.f32 %v865
  %vm873 = vmor %vm871, %vm872
  %v874 = vsel %vm873, %v865, %v870
  %v875 = vrsqrt.pop %v766
  %v876 = vmul.f32 %v875, %v766
  %v877 = vmul.f32 %v876, %v875
  %v878 = vmul.f32 0.5, %v877
  %v879 = vsub.f32 1.5, %v878
  %v880 = vmul.f32 %v875, %v879
  %vm881 = vweird.f32 %v766
  %vm882 = vweird.f32 %v875
  %vm883 = vmor %vm881, %vm882
  %v884 = vsel %vm883, %v875, %v880
  %v885 = vrsqrt.pop %v767
  %v886 = vmul.f32 %v885, %v767
  %v887 = vmul.f32 %v886, %v885
  %v888 = vmul.f32 0.5, %v887
  %v889 = vsub.f32 1.5, %v888
  %v890 = vmul.f32 %v885, %v889
  %vm891 = vweird.f32 %v767
  %vm892 = vweird.f32 %v885
  %vm893 = vmor %vm891, %vm892
  %v894 = vsel %vm893, %v885, %v890
  %v895 = vrsqrt.pop %v768
  %v896 = vmul.f32 %v895, %v768
  %v897 = vmul.f32 %v896, %v895
  %v898 = vmul.f32 0.5, %v897
  %v899 = vsub.f32 1.5, %v898
  %v900 = vmul.f32 %v895, %v899
  %vm901 = vweird.f32 %v768
  %vm902 = vweird.f32 %v895
  %vm903 = vmor %vm901, %vm902
  %v904 = vsel %vm903, %v895, %v900
  %v905 = vrsqrt.pop %v769
  %v906 = vmul.f32 %v905, %v769
  %v907 = vmul.f32 %v906, %v905
  %v908 = vmul.f32 0.5, %v907
  %v909 = vsub.f32 1.5, %v908
  %v910 = vmul.f32 %v905, %v909
  %vm911 = vweird.f32 %v769
  %vm912 = vweird.f32 %v905
  %vm913 = vmor %vm911, %vm912
  %v914 = vsel %vm913, %v905, %v910
  %v915 = vrsqrt.pop %v770
  %v916 = vmul.f32 %v915, %v770
  %v917 = vmul.f32 %v916, %v915
  %v918 = vmul.f32 0.5, %v917
  %v919 = vsub.f32 1.5, %v918
  %v920 = vmul.f32 %v915, %v919
  %vm921 = vweird.f32 %v770
  %vm922 = vweird.f32 %v915
  %vm923 = vmor %vm921, %vm922
  %v924 = vsel %vm923, %v915, %v920
  %v925 = vrsqrt.pop %v771
  %v926 = vmul.f32 %v925, %v771
  %v927 = vmul.f32 %v926, %v925
  %v928 = vmul.f32 0.5, %v927
  %v929 = vsub.f32 1.5, %v928
  %v930 = vmul.f32 %v925, %v929
  %vm931 = vweird.f32 %v771
  %vm932 = vweird.f32 %v925
  %vm933 = vmor %vm931, %vm932
  %v934 = vsel %vm933, %v925, %v930
  %v935 = vrsqrt.pop %v772
  %v936 = vmul.f32 %v935, %v772
  %v937 = vmul.f32 %v936, %v935
  %v938 = vmul.f32 0.5, %v937
  %v939 = vsub.f32 1.5, %v938
  %v940 = vmul.f32 %v935, %v939
  %vm941 = vweird.f32 %v772
  %vm942 = vweird.f32 %v935
  %vm943 = vmor %vm941, %vm942
  %v944 = vsel %vm943, %v935, %v940
  %v945 = vrsqrt.pop %v773
  %v946 = vmul.f32 %v945, %v773
  %v947 = vmul.f32 %v946, %v945
  %v948 = vmul.f32 0.5, %v947
  %v949 = vsub.f32 1.5, %v948
  %v950 = vmul.f32 %v945, %v949
  %vm951 = vweird.f32 %v773
  %vm952 = vweird.f32 %v945
  %vm953 = vmor %vm951, %vm952
  %v954 = vsel %vm953, %v945, %v950
  %v955 = vrsqrt.pop %v774
  %v956 = vmul.f32 %v955, %v774
  %v957 = vmul.f32 %v956, %v955
  %v958 = vmul.f32 0.5, %v957
  %v959 = vsub.f32 1.5, %v958
  %v960 = vmul.f32 %v955, %v959
  %vm961 = vweird.f32 %v774
  %vm962 = vweird.f32 %v955
  %vm963 = vmor %vm961, %vm962
  %v964 = vsel %vm963, %v955, %v960
  %v965 = vrsqrt.pop %v775
  %v966 = vmul.f32 %v965, %v775
  %v967 = vmul.f32 %v966, %v965
  %v968 = vmul.f32 0.5, %v967
  %v969 = vsub.f32 1.5, %v968
  %v970 = vmul.f32 %v965, %v969
  %vm971 = vweird.f32 %v775
  %vm972 = vweird.f32 %v965
  %vm973 = vmor %vm971, %vm972
  %v974 = vsel %vm973, %v965, %v970
  %v975 = vrsqrt.pop %v776
  %v976 = vmul.f32 %v975, %v776
  %v977 = vmul.f32 %v976, %v975
  %v978 = vmul.f32 0.5, %v977
  %v979 = vsub.f32 1.5, %v978
  %v980 = vmul.f32 %v975, %v979
  %vm981 = vweird.f32 %v776
  %vm982 = vweird.f32 %v975
  %vm983 = vmor %vm981, %vm982
  %v984 = vsel %vm983, %v975, %v980
  %v985 = vrsqrt.pop %v777
  %v986 = vmul.f32 %v985, %v777
  %v987 = vmul.f32 %v986, %v985
  %v988 = vmul.f32 0.5, %v987
  %v989 = vsub.f32 1.5, %v988
  %v990 = vmul.f32 %v985, %v989
  %vm991 = vweird.f32 %v777
  %vm992 = vweird.f32 %v985
  %vm993 = vmor %vm991, %vm992
  %v994 = vsel %vm993, %v985, %v990
  %v995 = vrsqrt.pop %v778
  %v996 = vmul.f32 %v995, %v778
  %v997 = vmul.f32 %v996, %v995
  %v998 = vmul.f32 0.5, %v997
  %v999 = vsub.f32 1.5, %v998
  %v1000 = vmul.f32 %v995, %v999
  %vm1001 = vweird.f32 %v778
  %vm1002 = vweird.f32 %v995
  %vm1003 = vmor %vm1001, %vm1002
  %v1004 = vsel %vm1003, %v995, %v1000
  %v1005 = vrsqrt.pop %v779
  %v1006 = vmul.f32 %v1005, %v779
  %v1007 = vmul.f32 %v1006, %v1005
  %v1008 = vmul.f32 0.5, %v1007
  %v1009 = vsub.f32 1.5, %v1008
  %v1010 = vmul.f32 %v1005, %v1009
  %vm1011 = vweird.f32 %v779
  %vm1012 = vweird.f32 %v1005
  %vm1013 = vmor %vm1011, %vm1012
  %v1014 = vsel %vm1013, %v1005, %v1010
  %v1015 = vrsqrt.pop %v780
  %v1016 = vmul.f32 %v1015, %v780
  %v1017 = vmul.f32 %v1016, %v1015
  %v1018 = vmul.f32 0.5, %v1017
  %v1019 = vsub.f32 1.5, %v1018
  %v1020 = vmul.f32 %v1015, %v1019
  %vm1021 = vweird.f32 %v780
  %vm1022 = vweird.f32 %v1015
  %vm1023 = vmor %vm1021, %vm1022
  %v1024 = vsel %vm1023, %v1015, %v1020
  %v1025 = vrsqrt.pop %v781
  %v1026 = vmul.f32 %v1025, %v781
  %v1027 = vmul.f32 %v1026, %v1025
  %v1028 = vmul.f32 0.5, %v1027
  %v1029 = vsub.f32 1.5, %v1028
  %v1030 = vmul.f32 %v1025, %v1029
  %vm1031 = vweird.f32 %v781
  %vm1032 = vweird.f32 %v1025
  %vm1033 = vmor %vm1031, %vm1032
  %v1034 = vsel %vm1033, %v1025, %v1030
  %v1035 = vrsqrt.pop %v782
  %v1036 = vmul.f32 %v1035, %v782
  %v1037 = vmul.f32 %v1036, %v1035
  %v1038 = vmul.f32 0.5, %v1037
  %v1039 = vsub.f32 1.5, %v1038
  %v1040 = vmul.f32 %v1035, %v1039
  %vm1041 = vweird.f32 %v782
  %vm1042 = vweird.f32 %v1035
  %vm1043 = vmor %vm1041, %vm1042
  %v1044 = vsel %vm1043, %v1035, %v1040
  %v1045 = vrsqrt.pop %v783
  %v1046 = vmul.f32 %v1045, %v783
  %v1047 = vmul.f32 %v1046, %v1045
  %v1048 = vmul.f32 0.5, %v1047
  %v1049 = vsub.f32 1.5, %v1048
  %v1050 = vmul.f32 %v1045, %v1049
  %vm1051 = vweird.f32 %v783
  %vm1052 = vweird.f32 %v1045
  %vm1053 = vmor %vm1051, %vm1052
  %v1054 = vsel %vm1053, %v1045, %v1050
  %v1055 = vrsqrt.pop %v784
  %v1056 = vmul.f32 %v1055, %v784
  %v1057 = vmul.f32 %v1056, %v1055
  %v1058 = vmul.f32 0.5, %v1057
  %v1059 = vsub.f32 1.5, %v1058
  %v1060 = vmul.f32 %v1055, %v1059
  %vm1061 = vweird.f32 %v784
  %vm1062 = vweird.f32 %v1055
  %vm1063 = vmor %vm1061, %vm1062
  %v1064 = vsel %vm1063, %v1055, %v1060
  %v1065 = vrsqrt.pop %v785
  %v1066 = vmul.f32 %v1065, %v785
  %v1067 = vmul.f32 %v1066, %v1065
  %v1068 = vmul.f32 0.5, %v1067
  %v1069 = vsub.f32 1.5, %v1068
  %v1070 = vmul.f32 %v1065, %v1069
  %vm1071 = vweird.f32 %v785
  %vm1072 = vweird.f32 %v1065
  %vm1073 = vmor %vm1071, %vm1072
  %v1074 = vsel %vm1073, %v1065, %v1070
  %v1075 = vrsqrt.pop %v786
  %v1076 = vmul.f32 %v1075, %v786
  %v1077 = vmul.f32 %v1076, %v1075
  %v1078 = vmul.f32 0.5, %v1077
  %v1079 = vsub.f32 1.5, %v1078
  %v1080 = vmul.f32 %v1075, %v1079
  %vm1081 = vweird.f32 %v786
  %vm1082 = vweird.f32 %v1075
  %vm1083 = vmor %vm1081, %vm1082
  %v1084 = vsel %vm1083, %v1075, %v1080
  %v1085 = vrsqrt.pop %v787
  %v1086 = vmul.f32 %v1085, %v787
  %v1087 = vmul.f32 %v1086, %v1085
  %v1088 = vmul.f32 0.5, %v1087
  %v1089 = vsub.f32 1.5, %v1088
  %v1090 = vmul.f32 %v1085, %v1089
  %vm1091 = vweird.f32 %v787
  %vm1092 = vweird.f32 %v1085
  %vm1093 = vmor %vm1091, %vm1092
  %v1094 = vsel %vm1093, %v1085, %v1090
  %v1095 = vrsqrt.pop %v788
  %v1096 = vmul.f32 %v1095, %v788
  %v1097 = vmul.f32 %v1096, %v1095
  %v1098 = vmul.f32 0.5, %v1097
  %v1099 = vsub.f32 1.5, %v1098
  %v1100 = vmul.f32 %v1095, %v1099
  %vm1101 = vweird.f32 %v788
  %vm1102 = vweird.f32 %v1095
  %vm1103 = vmor %vm1101, %vm1102
  %v1104 = vsel %vm1103, %v1095, %v1100
  %v1105 = vrsqrt.pop %v789
  %v1106 = vmul.f32 %v1105, %v789
  %v1107 = vmul.f32 %v1106, %v1105
  %v1108 = vmul.f32 0.5, %v1107
  %v1109 = vsub.f32 1.5, %v1108
  %v1110 = vmul.f32 %v1105, %v1109
  %vm1111 = vweird.f32 %v789
  %vm1112 = vweird.f32 %v1105
  %vm1113 = vmor %vm1111, %vm1112
  %v1114 = vsel %vm1113, %v1105, %v1110
  %v1115 = vrsqrt.pop %v790
  %v1116 = vmul.f32 %v1115, %v790
  %v1117 = vmul.f32 %v1116, %v1115
  %v1118 = vmul.f32 0.5, %v1117
  %v1119 = vsub.f32 1.5, %v1118
  %v1120 = vmul.f32 %v1115, %v1119
  %vm1121 = vweird.f32 %v790
  %vm1122 = vweird.f32 %v1115
  %vm1123 = vmor %vm1121, %vm1122
  %v1124 = vsel %vm1123, %v1115, %v1120
  %v1125 = vrsqrt.pop %v791
  %v1126 = vmul.f32 %v1125, %v791
  %v1127 = vmul.f32 %v1126, %v1125
  %v1128 = vmul.f32 0.5, %v1127
  %v1129 = vsub.f32 1.5, %v1128
  %v1130 = vmul.f32 %v1125, %v1129
  %vm1131 = vweird.f32 %v791
  %vm1132 = vweird.f32 %v1125
  %vm1133 = vmor %vm1131, %vm1132
  %v1134 = vsel %vm1133, %v1125, %v1130
  %v1135 = vrsqrt.pop %v792
  %v1136 = vmul.f32 %v1135, %v792
  %v1137 = vmul.f32 %v1136, %v1135
  %v1138 = vmul.f32 0.5, %v1137
  %v1139 = vsub.f32 1.5, %v1138
  %v1140 = vmul.f32 %v1135, %v1139
  %vm1141 = vweird.f32 %v792
  %vm1142 = vweird.f32 %v1135
  %vm1143 = vmor %vm1141, %vm1142
  %v1144 = vsel %vm1143, %v1135, %v1140
  %v1145 = vsel %vm793, 1.0, %v834
  %v1146 = vsel %vm794, 1.0, %v844
  %v1147 = vsel %vm795, 1.0, %v854
  %v1148 = vsel %vm796, 1.0, %v864
  %v1149 = vsel %vm797, 1.0, %v874
  %v1150 = vsel %vm798, 1.0, %v884
  %v1151 = vsel %vm799, 1.0, %v894
  %v1152 = vsel %vm800, 1.0, %v904
  %v1153 = vsel %vm801, 1.0, %v914
  %v1154 = vsel %vm802, 1.0, %v924
  %v1155 = vsel %vm803, 1.0, %v934
  %v1156 = vsel %vm804, 1.0, %v944
  %v1157 = vsel %vm805, 1.0, %v954
  %v1158 = vsel %vm806, 1.0, %v964
  %v1159 = vsel %vm807, 1.0, %v974
  %v1160 = vsel %vm808, 1.0, %v984
  %v1161 = vsel %vm809, 1.0, %v994
  %v1162 = vsel %vm810, 1.0, %v1004
  %v1163 = vsel %vm811, 1.0, %v1014
  %v1164 = vsel %vm812, 1.0, %v1024
  %v1165 = vsel %vm813, 1.0, %v1034
  %v1166 = vsel %vm814, 1.0, %v1044
  %v1167 = vsel %vm815, 1.0, %v1054
  %v1168 = vsel %vm816, 1.0, %v1064
  %v1169 = vsel %vm817, 1.0, %v1074
  %v1170 = vsel %vm818, 1.0, %v1084
  %v1171 = vsel %vm819, 1.0, %v1094
  %v1172 = vsel %vm820, 1.0, %v1104
  %v1173 = vsel %vm821, 1.0, %v1114
  %v1174 = vsel %vm822, 1.0, %v1124
  %v1175 = vsel %vm823, 1.0, %v1134
  %v1176 = vsel %vm824, 1.0, %v1144
  %v1177 = vadd.f32 %v17, %v21
  %v1178 = vadd.f32 %v1177, %v25
  %v1179 = vadd.f32 %v1178, %v29
  %v1180 = vadd.f32 %v1179, %v33
  %v1181 = vadd.f32 %v1180, %v37
  %v1182 = vadd.f32 %v1181, %v41
  %v1183 = vadd.f32 %v1182, %v45
  %v1184 = vadd.f32 %v1183, %v49
  %v1185 = vadd.f32 %v1184, %v53
  %v1186 = vadd.f32 %v1185, %v57
  %v1187 = vadd.f32 %v1186, %v61
  %v1188 = vadd.f32 %v1187, %v65
  %v1189 = vadd.f32 %v1188, %v69
  %v1190 = vadd.f32 %v1189, %v73
  %v1191 = vadd.f32 %v1190, %v77
  %v1192 = vadd.f32 %v18, %v22
  %v1193 = vadd.f32 %v1192, %v26
  %v1194 = vadd.f32 %v1193, %v30
  %v1195 = vadd.f32 %v1194, %v34
  %v1196 = vadd.f32 %v1195, %v38
  %v1197 = vadd.f32 %v1196, %v42
  %v1198 = vadd.f32 %v1197, %v46
  %v1199 = vadd.f32 %v1198, %v50
  %v1200 = vadd.f32 %v1199, %v54
  %v1201 = vadd.f32 %v1200, %v58
  %v1202 = vadd.f32 %v1201, %v62
  %v1203 = vadd.f32 %v1202, %v66
  %v1204 = vadd.f32 %v1203, %v70
  %v1205 = vadd.f32 %v1204, %v74
  %v1206 = vadd.f32 %v1205, %v78
  %v1207 = vadd.f32 %v82, %v98
  %v1208 = vadd.f32 %v1207, %v114
  %v1209 = vadd.f32 %v1208, %v130
  %v1210 = vadd.f32 %v1209, %v146
  %v1211 = vadd.f32 %v1210, %v162
  %v1212 = vadd.f32 %v1211, %v178
  %v1213 = vadd.f32 %v1212, %v194
  %v1214 = vadd.f32 %v1213, %v210
  %v1215 = vadd.f32 %v1214, %v226
  %v1216 = vadd.f32 %v1215, %v242
  %v1217 = vadd.f32 %v1216, %v258
  %v1218 = vadd.f32 %v1217, %v274
  %v1219 = vadd.f32 %v1218, %v290
  %v1220 = vadd.f32 %v1219, %v306
  %v1221 = vadd.f32 %v1220, %v322
  %v1222 = vadd.f32 %v90, %v106
  %v1223 = vadd.f32 %v1222, %v122
  %v1224 = vadd.f32 %v1223, %v138
  %v1225 = vadd.f32 %v1224, %v154
  %v1226 = vadd.f32 %v1225, %v170
  %v1227 = vadd.f32 %v1226, %v186
  %v1228 = vadd.f32 %v1227, %v202
  %v1229 = vadd.f32 %v1228, %v218
  %v1230 = vadd.f32 %v1229, %v234
  %v1231 = vadd.f32 %v1230, %v250
  %v1232 = vadd.f32 %v1231, %v266
  %v1233 = vadd.f32 %v1232, %v282
  %v1234 = vadd.f32 %v1233, %v298
  %v1235 = vadd.f32 %v1234, %v314
  %v1236 = vadd.f32 %v1235, %v330
  %v1237 = vrcp.pop 16.0
  %v1238 = vmul.f32 16.0, %v1237
  %v1239 = vsub.f32 1.0, %v1238
  %v1240 = vmul.f32 %v1237, %v1239
  %v1241 = vadd.f32 %v1237, %v1240
  %vm1242 = vweird.f32 %v1237
  %v1243 = vsel %vm1242, %v1237, %v1241
  %v1244 = vmul.f32 %v1191, %v1243
  %v1245 = vmul.f32 %v1206, %v1243
  %v1246 = vmul.f32 %v1221, %v1243
  %v1247 = vmul.f32 %v1236, %v1243
  %v1248 = vsub.f32 %v17, %v1244
  %v1249 = vsub.f32 %v18, %v1245
  %v1250 = vsub.f32 %v19, %v1246
  %v1251 = vsub.f32 %v20, %v1247
  %v1252 = vsub.f32 %v21, %v1244
  %v1253 = vsub.f32 %v22, %v1245
  %v1254 = vsub.f32 %v23, %v1246
  %v1255 = vsub.f32 %v24, %v1247
  %v1256 = vsub.f32 %v25, %v1244
  %v1257 = vsub.f32 %v26, %v1245
  %v1258 = vsub.f32 %v27, %v1246
  %v1259 = vsub.f32 %v28, %v1247
  %v1260 = vsub.f32 %v29, %v1244
  %v1261 = vsub.f32 %v30, %v1245
  %v1262 = vsub.f32 %v31, %v1246
  %v1263 = vsub.f32 %v32, %v1247
  %v1264 = vsub.f32 %v33, %v1244
  %v1265 = vsub.f32 %v34, %v1245
  %v1266 = vsub.f32 %v35, %v1246
  %v1267 = vsub.f32 %v36, %v1247
  %v1268 = vsub.f32 %v37, %v1244
  %v1269 = vsub.f32 %v38, %v1245
  %v1270 = vsub.f32 %v39, %v1246
  %v1271 = vsub.f32 %v40, %v1247
  %v1272 = vsub.f32 %v41, %v1244
  %v1273 = vsub.f32 %v42, %v1245
  %v1274 = vsub.f32 %v43, %v1246
  %v1275 = vsub.f32 %v44, %v1247
  %v1276 = vsub.f32 %v45, %v1244
  %v1277 = vsub.f32 %v46, %v1245
  %v1278 = vsub.f32 %v47, %v1246
  %v1279 = vsub.f32 %v48, %v1247
  %v1280 = vsub.f32 %v49, %v1244
  %v1281 = vsub.f32 %v50, %v1245
  %v1282 = vsub.f32 %v51, %v1246
  %v1283 = vsub.f32 %v52, %v1247
  %v1284 = vsub.f32 %v53, %v1244
  %v1285 = vsub.f32 %v54, %v1245
  %v1286 = vsub.f32 %v55, %v1246
  %v1287 = vsub.f32 %v56, %v1247
  %v1288 = vsub.f32 %v57, %v1244
  %v1289 = vsub.f32 %v58, %v1245
  %v1290 = vsub.f32 %v59, %v1246
  %v1291 = vsub.f32 %v60, %v1247
  %v1292 = vsub.f32 %v61, %v1244
  %v1293 = vsub.f32 %v62, %v1245
  %v1294 = vsub.f32 %v63, %v1246
  %v1295 = vsub.f32 %v64, %v1247
  %v1296 = vsub.f32 %v65, %v1244
  %v1297 = vsub.f32 %v66, %v1245
  %v1298 = vsub.f32 %v67, %v1246
  %v1299 = vsub.f32 %v68, %v1247
  %v1300 = vsub.f32 %v69, %v1244
  %v1301 = vsub.f32 %v70, %v1245
  %v1302 = vsub.f32 %v71, %v1246
  %v1303 = vsub.f32 %v72, %v1247
  %v1304 = vsub.f32 %v73, %v1244
  %v1305 = vsub.f32 %v74, %v1245
  %v1306 = vsub.f32 %v75, %v1246
  %v1307 = vsub.f32 %v76, %v1247
  %v1308 = vsub.f32 %v77, %v1244
  %v1309 = vsub.f32 %v78, %v1245
  %v1310 = vsub.f32 %v79, %v1246
  %v1311 = vsub.f32 %v80, %v1247
  %v1312 = vmul.f32 %v1248, %v1248
  %v1313 = vmul.f32 %v1249, %v1249
  %v1314 = vmul.f32 %v1250, %v1250
  %v1315 = vmul.f32 %v1251, %v1251
  %v1316 = vmul.f32 %v1252, %v1252
  %v1317 = vmul.f32 %v1253, %v1253
  %v1318 = vmul.f32 %v1254, %v1254
  %v1319 = vmul.f32 %v1255, %v1255
  %v1320 = vmul.f32 %v1256, %v1256
  %v1321 = vmul.f32 %v1257, %v1257
  %v1322 = vmul.f32 %v1258, %v1258
  %v1323 = vmul.f32 %v1259, %v1259
  %v1324 = vmul.f32 %v1260, %v1260
  %v1325 = vmul.f32 %v1261, %v1261
  %v1326 = vmul.f32 %v1262, %v1262
  %v1327 = vmul.f32 %v1263, %v1263
  %v1328 = vmul.f32 %v1264, %v1264
  %v1329 = vmul.f32 %v1265, %v1265
  %v1330 = vmul.f32 %v1266, %v1266
  %v1331 = vmul.f32 %v1267, %v1267
  %v1332 = vmul.f32 %v1268, %v1268
  %v1333 = vmul.f32 %v1269, %v1269
  %v1334 = vmul.f32 %v1270, %v1270
  %v1335 = vmul.f32 %v1271, %v1271
  %v1336 = vmul.f32 %v1272, %v1272
  %v1337 = vmul.f32 %v1273, %v1273
  %v1338 = vmul.f32 %v1274, %v1274
  %v1339 = vmul.f32 %v1275, %v1275
  %v1340 = vmul.f32 %v1276, %v1276
  %v1341 = vmul.f32 %v1277, %v1277
  %v1342 = vmul.f32 %v1278, %v1278
  %v1343 = vmul.f32 %v1279, %v1279
  %v1344 = vmul.f32 %v1280, %v1280
  %v1345 = vmul.f32 %v1281, %v1281
  %v1346 = vmul.f32 %v1282, %v1282
  %v1347 = vmul.f32 %v1283, %v1283
  %v1348 = vmul.f32 %v1284, %v1284
  %v1349 = vmul.f32 %v1285, %v1285
  %v1350 = vmul.f32 %v1286, %v1286
  %v1351 = vmul.f32 %v1287, %v1287
  %v1352 = vmul.f32 %v1288, %v1288
  %v1353 = vmul.f32 %v1289, %v1289
  %v1354 = vmul.f32 %v1290, %v1290
  %v1355 = vmul.f32 %v1291, %v1291
  %v1356 = vmul.f32 %v1292, %v1292
  %v1357 = vmul.f32 %v1293, %v1293
  %v1358 = vmul.f32 %v1294, %v1294
  %v1359 = vmul.f32 %v1295, %v1295
  %v1360 = vmul.f32 %v1296, %v1296
  %v1361 = vmul.f32 %v1297, %v1297
  %v1362 = vmul.f32 %v1298, %v1298
  %v1363 = vmul.f32 %v1299, %v1299
  %v1364 = vmul.f32 %v1300, %v1300
  %v1365 = vmul.f32 %v1301, %v1301
  %v1366 = vmul.f32 %v1302, %v1302
  %v1367 = vmul.f32 %v1303, %v1303
  %v1368 = vmul.f32 %v1304, %v1304
  %v1369 = vmul.f32 %v1305, %v1305
  %v1370 = vmul.f32 %v1306, %v1306
  %v1371 = vmul.f32 %v1307, %v1307
  %v1372 = vmul.f32 %v1308, %v1308
  %v1373 = vmul.f32 %v1309, %v1309
  %v1374 = vmul.f32 %v1310, %v1310
  %v1375 = vmul.f32 %v1311, %v1311
  %v1376 = vadd.f32 %v1312, %v1316
  %v1377 = vadd.f32 %v1376, %v1320
  %v1378 = vadd.f32 %v1377, %v1324
  %v1379 = vadd.f32 %v1378, %v1328
  %v1380 = vadd.f32 %v1379, %v1332
  %v1381 = vadd.f32 %v1380, %v1336
  %v1382 = vadd.f32 %v1381, %v1340
  %v1383 = vadd.f32 %v1382, %v1344
  %v1384 = vadd.f32 %v1383, %v1348
  %v1385 = vadd.f32 %v1384, %v1352
  %v1386 = vadd.f32 %v1385, %v1356
  %v1387 = vadd.f32 %v1386, %v1360
  %v1388 = vadd.f32 %v1387, %v1364
  %v1389 = vadd.f32 %v1388, %v1368
  %v1390 = vadd.f32 %v1389, %v1372
  %v1391 = vadd.f32 %v1313, %v1317
  %v1392 = vadd.f32 %v1391, %v1321
  %v1393 = vadd.f32 %v1392, %v1325
  %v1394 = vadd.f32 %v1393, %v1329
  %v1395 = vadd.f32 %v1394, %v1333
  %v1396 = vadd.f32 %v1395, %v1337
  %v1397 = vadd.f32 %v1396, %v1341
  %v1398 = vadd.f32 %v1397, %v1345
  %v1399 = vadd.f32 %v1398, %v1349
  %v1400 = vadd.f32 %v1399, %v1353
  %v1401 = vadd.f32 %v1400, %v1357
  %v1402 = vadd.f32 %v1401, %v1361
  %v1403 = vadd.f32 %v1402, %v1365
  %v1404 = vadd.f32 %v1403, %v1369
  %v1405 = vadd.f32 %v1404, %v1373
  %v1406 = vsel %vm81, %v1314, 0.0
  %v1407 = vsel %vm81, %v1318, 0.0
  %v1408 = vadd.f32 %v1406, %v1407
  %v1409 = vsel %vm81, %v1322, 0.0
  %v1410 = vadd.f32 %v1408, %v1409
  %v1411 = vsel %vm81, %v1326, 0.0
  %v1412 = vadd.f32 %v1410, %v1411
  %v1413 = vsel %vm81, %v1330, 0.0
  %v1414 = vadd.f32 %v1412, %v1413
  %v1415 = vsel %vm81, %v1334, 0.0
  %v1416 = vadd.f32 %v1414, %v1415
  %v1417 = vsel %vm81, %v1338, 0.0
  %v1418 = vadd.f32 %v1416, %v1417
  %v1419 = vsel %vm81, %v1342, 0.0
  %v1420 = vadd.f32 %v1418, %v1419
  %v1421 = vsel %vm81, %v1346, 0.0
  %v1422 = vadd.f32 %v1420, %v1421
  %v1423 = vsel %vm81, %v1350, 0.0
  %v1424 = vadd.f32 %v1422, %v1423
  %v1425 = vsel %vm81, %v1354, 0.0
  %v1426 = vadd.f32 %v1424, %v1425
  %v1427 = vsel %vm81, %v1358, 0.0
  %v1428 = vadd.f32 %v1426, %v1427
  %v1429 = vsel %vm81, %v1362, 0.0
  %v1430 = vadd.f32 %v1428, %v1429
  %v1431 = vsel %vm81, %v1366, 0.0
  %v1432 = vadd.f32 %v1430, %v1431
  %v1433 = vsel %vm81, %v1370, 0.0
  %v1434 = vadd.f32 %v1432, %v1433
  %v1435 = vsel %vm81, %v1374, 0.0
  %v1436 = vadd.f32 %v1434, %v1435
  %v1437 = vsel %vm81, %v1315, 0.0
  %v1438 = vsel %vm81, %v1319, 0.0
  %v1439 = vadd.f32 %v1437, %v1438
  %v1440 = vsel %vm81, %v1323, 0.0
  %v1441 = vadd.f32 %v1439, %v1440
  %v1442 = vsel %vm81, %v1327, 0.0
  %v1443 = vadd.f32 %v1441, %v1442
  %v1444 = vsel %vm81, %v1331, 0.0
  %v1445 = vadd.f32 %v1443, %v1444
  %v1446 = vsel %vm81, %v1335, 0.0
  %v1447 = vadd.f32 %v1445, %v1446
  %v1448 = vsel %vm81, %v1339, 0.0
  %v1449 = vadd.f32 %v1447, %v1448
  %v1450 = vsel %vm81, %v1343, 0.0
  %v1451 = vadd.f32 %v1449, %v1450
  %v1452 = vsel %vm81, %v1347, 0.0
  %v1453 = vadd.f32 %v1451, %v1452
  %v1454 = vsel %vm81, %v1351, 0.0
  %v1455 = vadd.f32 %v1453, %v1454
  %v1456 = vsel %vm81, %v1355, 0.0
  %v1457 = vadd.f32 %v1455, %v1456
  %v1458 = vsel %vm81, %v1359, 0.0
  %v1459 = vadd.f32 %v1457, %v1458
  %v1460 = vsel %vm81, %v1363, 0.0
  %v1461 = vadd.f32 %v1459, %v1460
  %v1462 = vsel %vm81, %v1367, 0.0
  %v1463 = vadd.f32 %v1461, %v1462
  %v1464 = vsel %vm81, %v1371, 0.0
  %v1465 = vadd.f32 %v1463, %v1464
  %v1466 = vsel %vm81, %v1375, 0.0
  %v1467 = vadd.f32 %v1465, %v1466
  %v1468 = vmul.f32 %v1390, 0.06666667
  %v1469 = vmul.f32 %v1405, 0.06666667
  %v1470 = vmul.f32 %v1436, 0.06666667
  %v1471 = vmul.f32 %v1467, 0.06666667
  %v1472 = vrsqrt.pop %v1468
  %v1473 = vmul.f32 %v1472, %v1468
  %v1474 = vmul.f32 %v1473, %v1472
  %v1475 = vmul.f32 0.5, %v1474
  %v1476 = vsub.f32 1.5, %v1475
  %v1477 = vmul.f32 %v1472, %v1476
  %vm1478 = vweird.f32 %v1468
  %vm1479 = vweird.f32 %v1472
  %vm1480 = vmor %vm1478, %vm1479
  %v1481 = vsel %vm1480, %v1472, %v1477
  %v1482 = vrsqrt.pop %v1469
  %v1483 = vmul.f32 %v1482, %v1469
  %v1484 = vmul.f32 %v1483, %v1482
  %v1485 = vmul.f32 0.5, %v1484
  %v1486 = vsub.f32 1.5, %v1485
  %v1487 = vmul.f32 %v1482, %v1486
  %vm1488 = vweird.f32 %v1469
  %vm1489 = vweird.f32 %v1482
  %vm1490 = vmor %vm1488, %vm1489
  %v1491 = vsel %vm1490, %v1482, %v1487
  %v1492 = vrsqrt.pop %v1470
  %v1493 = vmul.f32 %v1492, %v1470
  %v1494 = vmul.f32 %v1493, %v1492
  %v1495 = vmul.f32 0.5, %v1494
  %v1496 = vsub.f32 1.5, %v1495
  %v1497 = vmul.f32 %v1492, %v1496
  %vm1498 = vweird.f32 %v1470
  %vm1499 = vweird.f32 %v1492
  %vm1500 = vmor %vm1498, %vm1499
  %v1501 = vsel %vm1500, %v1492, %v1497
  %v1502 = vrsqrt.pop %v1471
  %v1503 = vmul.f32 %v1502, %v1471
  %v1504 = vmul.f32 %v1503, %v1502
  %v1505 = vmul.f32 0.5, %v1504
  %v1506 = vsub.f32 1.5, %v1505
  %v1507 = vmul.f32 %v1502, %v1506
  %vm1508 = vweird.f32 %v1471
  %vm1509 = vweird.f32 %v1502
  %vm1510 = vmor %vm1508, %vm1509
  %v1511 = vsel %vm1510, %v1502, %v1507
  %v1512 = vld [vmem:[%s1] sm:$0xff]
  %v1513 = vld [vmem:[%s1 + $0x8] sm:$0x3]
  %1515 = vset.pattern.permute.xlu0 0
  %1516 = vperm.xlu0 %1515, %v1512
  %v1517 = vpop.permute.xlu0 %1516
  %1520 = vset.pattern.permute.xlu0 0
  %1521 = vperm.xlu0 %1520, %v1513
  %v1522 = vpop.permute.xlu0 %1521
  %v1524 = vmul.f32 %v1517, %v1481
  %v1525 = vmul.f32 %v1517, %v1491
  %v1526 = vmul.f32 %v1522, %v1501
  %v1527 = vmul.f32 %v1522, %v1511
  %v1528 = vld [vmem:[%s2] sm:$0x1]
  %v1529 = vld [vmem:[%s2 + $0x1] sm:$0x1]
  %v1530 = vld [vmem:[%s2 + $0x2] sm:$0x1]
  %v1531 = vld [vmem:[%s2 + $0x3] sm:$0x1]
  %v1532 = vld [vmem:[%s2 + $0x4] sm:$0x1]
  %v1533 = vld [vmem:[%s2 + $0x5] sm:$0x1]
  %v1534 = vld [vmem:[%s2 + $0x6] sm:$0x1]
  %v1535 = vld [vmem:[%s2 + $0x7] sm:$0x1]
  %v1536 = vld [vmem:[%s2 + $0x8] sm:$0x1]
  %v1537 = vld [vmem:[%s2 + $0x9] sm:$0x1]
  %v1538 = vld [vmem:[%s2 + $0xa] sm:$0x1]
  %v1539 = vld [vmem:[%s2 + $0xb] sm:$0x1]
  %v1540 = vld [vmem:[%s2 + $0xc] sm:$0x1]
  %v1541 = vld [vmem:[%s2 + $0xd] sm:$0x1]
  %v1542 = vld [vmem:[%s2 + $0xe] sm:$0x1]
  %v1543 = vld [vmem:[%s2 + $0xf] sm:$0x1]
  %1545 = vset.pattern.permute.xlu0 0
  %1546 = vperm.xlu0 %1545, %v1528
  %v1547 = vpop.permute.xlu0 %1546
  %v1549 = vperm.slane %v1547, 0
  %1551 = vset.pattern.permute.xlu0 0
  %1552 = vperm.xlu0 %1551, %v1529
  %v1553 = vpop.permute.xlu0 %1552
  %v1555 = vperm.slane %v1553, 0
  %1557 = vset.pattern.permute.xlu0 0
  %1558 = vperm.xlu0 %1557, %v1530
  %v1559 = vpop.permute.xlu0 %1558
  %v1561 = vperm.slane %v1559, 0
  %1563 = vset.pattern.permute.xlu0 0
  %1564 = vperm.xlu0 %1563, %v1531
  %v1565 = vpop.permute.xlu0 %1564
  %v1567 = vperm.slane %v1565, 0
  %1569 = vset.pattern.permute.xlu0 0
  %1570 = vperm.xlu0 %1569, %v1532
  %v1571 = vpop.permute.xlu0 %1570
  %v1573 = vperm.slane %v1571, 0
  %1575 = vset.pattern.permute.xlu0 0
  %1576 = vperm.xlu0 %1575, %v1533
  %v1577 = vpop.permute.xlu0 %1576
  %v1579 = vperm.slane %v1577, 0
  %1581 = vset.pattern.permute.xlu0 0
  %1582 = vperm.xlu0 %1581, %v1534
  %v1583 = vpop.permute.xlu0 %1582
  %v1585 = vperm.slane %v1583, 0
  %1587 = vset.pattern.permute.xlu0 0
  %1588 = vperm.xlu0 %1587, %v1535
  %v1589 = vpop.permute.xlu0 %1588
  %v1591 = vperm.slane %v1589, 0
  %1593 = vset.pattern.permute.xlu0 0
  %1594 = vperm.xlu0 %1593, %v1536
  %v1595 = vpop.permute.xlu0 %1594
  %v1597 = vperm.slane %v1595, 0
  %1599 = vset.pattern.permute.xlu0 0
  %1600 = vperm.xlu0 %1599, %v1537
  %v1601 = vpop.permute.xlu0 %1600
  %v1603 = vperm.slane %v1601, 0
  %1605 = vset.pattern.permute.xlu0 0
  %1606 = vperm.xlu0 %1605, %v1538
  %v1607 = vpop.permute.xlu0 %1606
  %v1609 = vperm.slane %v1607, 0
  %1611 = vset.pattern.permute.xlu0 0
  %1612 = vperm.xlu0 %1611, %v1539
  %v1613 = vpop.permute.xlu0 %1612
  %v1615 = vperm.slane %v1613, 0
  %1617 = vset.pattern.permute.xlu0 0
  %1618 = vperm.xlu0 %1617, %v1540
  %v1619 = vpop.permute.xlu0 %1618
  %v1621 = vperm.slane %v1619, 0
  %1623 = vset.pattern.permute.xlu0 0
  %1624 = vperm.xlu0 %1623, %v1541
  %v1625 = vpop.permute.xlu0 %1624
  %v1627 = vperm.slane %v1625, 0
  %1629 = vset.pattern.permute.xlu0 0
  %1630 = vperm.xlu0 %1629, %v1542
  %v1631 = vpop.permute.xlu0 %1630
  %v1633 = vperm.slane %v1631, 0
  %1635 = vset.pattern.permute.xlu0 0
  %1636 = vperm.xlu0 %1635, %v1543
  %v1637 = vpop.permute.xlu0 %1636
  %v1639 = vperm.slane %v1637, 0
  %v1640 = vmul.f32 %v1549, %v1145
  %v1641 = vmul.f32 %v1549, %v1146
  %v1642 = vmul.f32 %v1555, %v1147
  %v1643 = vmul.f32 %v1555, %v1148
  %v1644 = vmul.f32 %v1561, %v1149
  %v1645 = vmul.f32 %v1561, %v1150
  %v1646 = vmul.f32 %v1567, %v1151
  %v1647 = vmul.f32 %v1567, %v1152
  %v1648 = vmul.f32 %v1573, %v1153
  %v1649 = vmul.f32 %v1573, %v1154
  %v1650 = vmul.f32 %v1579, %v1155
  %v1651 = vmul.f32 %v1579, %v1156
  %v1652 = vmul.f32 %v1585, %v1157
  %v1653 = vmul.f32 %v1585, %v1158
  %v1654 = vmul.f32 %v1591, %v1159
  %v1655 = vmul.f32 %v1591, %v1160
  %v1656 = vmul.f32 %v1597, %v1161
  %v1657 = vmul.f32 %v1597, %v1162
  %v1658 = vmul.f32 %v1603, %v1163
  %v1659 = vmul.f32 %v1603, %v1164
  %v1660 = vmul.f32 %v1609, %v1165
  %v1661 = vmul.f32 %v1609, %v1166
  %v1662 = vmul.f32 %v1615, %v1167
  %v1663 = vmul.f32 %v1615, %v1168
  %v1664 = vmul.f32 %v1621, %v1169
  %v1665 = vmul.f32 %v1621, %v1170
  %v1666 = vmul.f32 %v1627, %v1171
  %v1667 = vmul.f32 %v1627, %v1172
  %v1668 = vmul.f32 %v1633, %v1173
  %v1669 = vmul.f32 %v1633, %v1174
  %v1670 = vmul.f32 %v1639, %v1175
  %v1671 = vmul.f32 %v1639, %v1176
  %v1672 = vmul.f32 %v1524, %v1248
  %v1673 = vmul.f32 %v1525, %v1249
  %v1674 = vmul.f32 %v1526, %v1250
  %v1675 = vmul.f32 %v1527, %v1251
  %v1676 = vmul.f32 %v1524, %v1252
  %v1677 = vmul.f32 %v1525, %v1253
  %v1678 = vmul.f32 %v1526, %v1254
  %v1679 = vmul.f32 %v1527, %v1255
  %v1680 = vmul.f32 %v1524, %v1256
  %v1681 = vmul.f32 %v1525, %v1257
  %v1682 = vmul.f32 %v1526, %v1258
  %v1683 = vmul.f32 %v1527, %v1259
  %v1684 = vmul.f32 %v1524, %v1260
  %v1685 = vmul.f32 %v1525, %v1261
  %v1686 = vmul.f32 %v1526, %v1262
  %v1687 = vmul.f32 %v1527, %v1263
  %v1688 = vmul.f32 %v1524, %v1264
  %v1689 = vmul.f32 %v1525, %v1265
  %v1690 = vmul.f32 %v1526, %v1266
  %v1691 = vmul.f32 %v1527, %v1267
  %v1692 = vmul.f32 %v1524, %v1268
  %v1693 = vmul.f32 %v1525, %v1269
  %v1694 = vmul.f32 %v1526, %v1270
  %v1695 = vmul.f32 %v1527, %v1271
  %v1696 = vmul.f32 %v1524, %v1272
  %v1697 = vmul.f32 %v1525, %v1273
  %v1698 = vmul.f32 %v1526, %v1274
  %v1699 = vmul.f32 %v1527, %v1275
  %v1700 = vmul.f32 %v1524, %v1276
  %v1701 = vmul.f32 %v1525, %v1277
  %v1702 = vmul.f32 %v1526, %v1278
  %v1703 = vmul.f32 %v1527, %v1279
  %v1704 = vmul.f32 %v1524, %v1280
  %v1705 = vmul.f32 %v1525, %v1281
  %v1706 = vmul.f32 %v1526, %v1282
  %v1707 = vmul.f32 %v1527, %v1283
  %v1708 = vmul.f32 %v1524, %v1284
  %v1709 = vmul.f32 %v1525, %v1285
  %v1710 = vmul.f32 %v1526, %v1286
  %v1711 = vmul.f32 %v1527, %v1287
  %v1712 = vmul.f32 %v1524, %v1288
  %v1713 = vmul.f32 %v1525, %v1289
  %v1714 = vmul.f32 %v1526, %v1290
  %v1715 = vmul.f32 %v1527, %v1291
  %v1716 = vmul.f32 %v1524, %v1292
  %v1717 = vmul.f32 %v1525, %v1293
  %v1718 = vmul.f32 %v1526, %v1294
  %v1719 = vmul.f32 %v1527, %v1295
  %v1720 = vmul.f32 %v1524, %v1296
  %v1721 = vmul.f32 %v1525, %v1297
  %v1722 = vmul.f32 %v1526, %v1298
  %v1723 = vmul.f32 %v1527, %v1299
  %v1724 = vmul.f32 %v1524, %v1300
  %v1725 = vmul.f32 %v1525, %v1301
  %v1726 = vmul.f32 %v1526, %v1302
  %v1727 = vmul.f32 %v1527, %v1303
  %v1728 = vmul.f32 %v1524, %v1304
  %v1729 = vmul.f32 %v1525, %v1305
  %v1730 = vmul.f32 %v1526, %v1306
  %v1731 = vmul.f32 %v1527, %v1307
  %v1732 = vmul.f32 %v1524, %v1308
  %v1733 = vmul.f32 %v1525, %v1309
  %v1734 = vmul.f32 %v1526, %v1310
  %v1735 = vmul.f32 %v1527, %v1311
  %v1736 = vmul.f32 %v1640, %v377
  %v1737 = vmul.f32 %v1641, %v378
  %v1738 = vmul.f32 %v1640, %v379
  %v1739 = vmul.f32 %v1641, %v380
  %v1740 = vmul.f32 %v1642, %v381
  %v1741 = vmul.f32 %v1643, %v382
  %v1742 = vmul.f32 %v1642, %v383
  %v1743 = vmul.f32 %v1643, %v384
  %v1744 = vmul.f32 %v1644, %v385
  %v1745 = vmul.f32 %v1645, %v386
  %v1746 = vmul.f32 %v1644, %v387
  %v1747 = vmul.f32 %v1645, %v388
  %v1748 = vmul.f32 %v1646, %v389
  %v1749 = vmul.f32 %v1647, %v390
  %v1750 = vmul.f32 %v1646, %v391
  %v1751 = vmul.f32 %v1647, %v392
  %v1752 = vmul.f32 %v1648, %v393
  %v1753 = vmul.f32 %v1649, %v394
  %v1754 = vmul.f32 %v1648, %v395
  %v1755 = vmul.f32 %v1649, %v396
  %v1756 = vmul.f32 %v1650, %v397
  %v1757 = vmul.f32 %v1651, %v398
  %v1758 = vmul.f32 %v1650, %v399
  %v1759 = vmul.f32 %v1651, %v400
  %v1760 = vmul.f32 %v1652, %v401
  %v1761 = vmul.f32 %v1653, %v402
  %v1762 = vmul.f32 %v1652, %v403
  %v1763 = vmul.f32 %v1653, %v404
  %v1764 = vmul.f32 %v1654, %v405
  %v1765 = vmul.f32 %v1655, %v406
  %v1766 = vmul.f32 %v1654, %v407
  %v1767 = vmul.f32 %v1655, %v408
  %v1768 = vmul.f32 %v1656, %v409
  %v1769 = vmul.f32 %v1657, %v410
  %v1770 = vmul.f32 %v1656, %v411
  %v1771 = vmul.f32 %v1657, %v412
  %v1772 = vmul.f32 %v1658, %v413
  %v1773 = vmul.f32 %v1659, %v414
  %v1774 = vmul.f32 %v1658, %v415
  %v1775 = vmul.f32 %v1659, %v416
  %v1776 = vmul.f32 %v1660, %v417
  %v1777 = vmul.f32 %v1661, %v418
  %v1778 = vmul.f32 %v1660, %v419
  %v1779 = vmul.f32 %v1661, %v420
  %v1780 = vmul.f32 %v1662, %v421
  %v1781 = vmul.f32 %v1663, %v422
  %v1782 = vmul.f32 %v1662, %v423
  %v1783 = vmul.f32 %v1663, %v424
  %v1784 = vmul.f32 %v1664, %v425
  %v1785 = vmul.f32 %v1665, %v426
  %v1786 = vmul.f32 %v1664, %v427
  %v1787 = vmul.f32 %v1665, %v428
  %v1788 = vmul.f32 %v1666, %v429
  %v1789 = vmul.f32 %v1667, %v430
  %v1790 = vmul.f32 %v1666, %v431
  %v1791 = vmul.f32 %v1667, %v432
  %v1792 = vmul.f32 %v1668, %v433
  %v1793 = vmul.f32 %v1669, %v434
  %v1794 = vmul.f32 %v1668, %v435
  %v1795 = vmul.f32 %v1669, %v436
  %v1796 = vmul.f32 %v1670, %v437
  %v1797 = vmul.f32 %v1671, %v438
  %v1798 = vmul.f32 %v1670, %v439
  %v1799 = vmul.f32 %v1671, %v440
  %v1800 = vadd.f32 %v1672, %v1736
  %v1801 = vadd.f32 %v1673, %v1737
  %v1802 = vadd.f32 %v1674, %v1738
  %v1803 = vadd.f32 %v1675, %v1739
  %v1804 = vadd.f32 %v1676, %v1740
  %v1805 = vadd.f32 %v1677, %v1741
  %v1806 = vadd.f32 %v1678, %v1742
  %v1807 = vadd.f32 %v1679, %v1743
  %v1808 = vadd.f32 %v1680, %v1744
  %v1809 = vadd.f32 %v1681, %v1745
  %v1810 = vadd.f32 %v1682, %v1746
  %v1811 = vadd.f32 %v1683, %v1747
  %v1812 = vadd.f32 %v1684, %v1748
  %v1813 = vadd.f32 %v1685, %v1749
  %v1814 = vadd.f32 %v1686, %v1750
  %v1815 = vadd.f32 %v1687, %v1751
  %v1816 = vadd.f32 %v1688, %v1752
  %v1817 = vadd.f32 %v1689, %v1753
  %v1818 = vadd.f32 %v1690, %v1754
  %v1819 = vadd.f32 %v1691, %v1755
  %v1820 = vadd.f32 %v1692, %v1756
  %v1821 = vadd.f32 %v1693, %v1757
  %v1822 = vadd.f32 %v1694, %v1758
  %v1823 = vadd.f32 %v1695, %v1759
  %v1824 = vadd.f32 %v1696, %v1760
  %v1825 = vadd.f32 %v1697, %v1761
  %v1826 = vadd.f32 %v1698, %v1762
  %v1827 = vadd.f32 %v1699, %v1763
  %v1828 = vadd.f32 %v1700, %v1764
  %v1829 = vadd.f32 %v1701, %v1765
  %v1830 = vadd.f32 %v1702, %v1766
  %v1831 = vadd.f32 %v1703, %v1767
  %v1832 = vadd.f32 %v1704, %v1768
  %v1833 = vadd.f32 %v1705, %v1769
  %v1834 = vadd.f32 %v1706, %v1770
  %v1835 = vadd.f32 %v1707, %v1771
  %v1836 = vadd.f32 %v1708, %v1772
  %v1837 = vadd.f32 %v1709, %v1773
  %v1838 = vadd.f32 %v1710, %v1774
  %v1839 = vadd.f32 %v1711, %v1775
  %v1840 = vadd.f32 %v1712, %v1776
  %v1841 = vadd.f32 %v1713, %v1777
  %v1842 = vadd.f32 %v1714, %v1778
  %v1843 = vadd.f32 %v1715, %v1779
  %v1844 = vadd.f32 %v1716, %v1780
  %v1845 = vadd.f32 %v1717, %v1781
  %v1846 = vadd.f32 %v1718, %v1782
  %v1847 = vadd.f32 %v1719, %v1783
  %v1848 = vadd.f32 %v1720, %v1784
  %v1849 = vadd.f32 %v1721, %v1785
  %v1850 = vadd.f32 %v1722, %v1786
  %v1851 = vadd.f32 %v1723, %v1787
  %v1852 = vadd.f32 %v1724, %v1788
  %v1853 = vadd.f32 %v1725, %v1789
  %v1854 = vadd.f32 %v1726, %v1790
  %v1855 = vadd.f32 %v1727, %v1791
  %v1856 = vadd.f32 %v1728, %v1792
  %v1857 = vadd.f32 %v1729, %v1793
  %v1858 = vadd.f32 %v1730, %v1794
  %v1859 = vadd.f32 %v1731, %v1795
  %v1860 = vadd.f32 %v1732, %v1796
  %v1861 = vadd.f32 %v1733, %v1797
  %v1862 = vadd.f32 %v1734, %v1798
  %v1863 = vadd.f32 %v1735, %v1799
  %v1864 = vld [vmem:[%s3] sm:$0xff]
  %v1865 = vld [vmem:[%s3 + $0x8] sm:$0x3]
  %v1866 = vld [vmem:[%s3 + $0x10] sm:$0xff]
  %v1867 = vld [vmem:[%s3 + $0x18] sm:$0x3]
  %v1868 = vld [vmem:[%s3 + $0x20] sm:$0xff]
  %v1869 = vld [vmem:[%s3 + $0x28] sm:$0x3]
  %v1870 = vld [vmem:[%s3 + $0x30] sm:$0xff]
  %v1871 = vld [vmem:[%s3 + $0x38] sm:$0x3]
  %v1872 = vld [vmem:[%s3 + $0x40] sm:$0xff]
  %v1873 = vld [vmem:[%s3 + $0x48] sm:$0x3]
  %v1874 = vld [vmem:[%s3 + $0x50] sm:$0xff]
  %v1875 = vld [vmem:[%s3 + $0x58] sm:$0x3]
  %v1876 = vld [vmem:[%s3 + $0x60] sm:$0xff]
  %v1877 = vld [vmem:[%s3 + $0x68] sm:$0x3]
  %v1878 = vld [vmem:[%s3 + $0x70] sm:$0xff]
  %v1879 = vld [vmem:[%s3 + $0x78] sm:$0x3]
  %v1880 = vld [vmem:[%s3 + $0x80] sm:$0xff]
  %v1881 = vld [vmem:[%s3 + $0x88] sm:$0x3]
  %v1882 = vld [vmem:[%s3 + $0x90] sm:$0xff]
  %v1883 = vld [vmem:[%s3 + $0x98] sm:$0x3]
  %v1884 = vld [vmem:[%s3 + $0xa0] sm:$0xff]
  %v1885 = vld [vmem:[%s3 + $0xa8] sm:$0x3]
  %v1886 = vld [vmem:[%s3 + $0xb0] sm:$0xff]
  %v1887 = vld [vmem:[%s3 + $0xb8] sm:$0x3]
  %v1888 = vld [vmem:[%s3 + $0xc0] sm:$0xff]
  %v1889 = vld [vmem:[%s3 + $0xc8] sm:$0x3]
  %v1890 = vld [vmem:[%s3 + $0xd0] sm:$0xff]
  %v1891 = vld [vmem:[%s3 + $0xd8] sm:$0x3]
  %v1892 = vld [vmem:[%s3 + $0xe0] sm:$0xff]
  %v1893 = vld [vmem:[%s3 + $0xe8] sm:$0x3]
  %v1894 = vld [vmem:[%s3 + $0xf0] sm:$0xff]
  %v1895 = vld [vmem:[%s3 + $0xf8] sm:$0x3]
  %1897 = vset.pattern.permute.xlu0 0
  %1898 = vperm.xlu0 %1897, %v1864
  %v1899 = vpop.permute.xlu0 %1898
  %1902 = vset.pattern.permute.xlu0 0
  %1903 = vperm.xlu0 %1902, %v1865
  %v1904 = vpop.permute.xlu0 %1903
  %1907 = vset.pattern.permute.xlu0 0
  %1908 = vperm.xlu0 %1907, %v1866
  %v1909 = vpop.permute.xlu0 %1908
  %1912 = vset.pattern.permute.xlu0 0
  %1913 = vperm.xlu0 %1912, %v1867
  %v1914 = vpop.permute.xlu0 %1913
  %1917 = vset.pattern.permute.xlu0 0
  %1918 = vperm.xlu0 %1917, %v1868
  %v1919 = vpop.permute.xlu0 %1918
  %1922 = vset.pattern.permute.xlu0 0
  %1923 = vperm.xlu0 %1922, %v1869
  %v1924 = vpop.permute.xlu0 %1923
  %1927 = vset.pattern.permute.xlu0 0
  %1928 = vperm.xlu0 %1927, %v1870
  %v1929 = vpop.permute.xlu0 %1928
  %1932 = vset.pattern.permute.xlu0 0
  %1933 = vperm.xlu0 %1932, %v1871
  %v1934 = vpop.permute.xlu0 %1933
  %1937 = vset.pattern.permute.xlu0 0
  %1938 = vperm.xlu0 %1937, %v1872
  %v1939 = vpop.permute.xlu0 %1938
  %1942 = vset.pattern.permute.xlu0 0
  %1943 = vperm.xlu0 %1942, %v1873
  %v1944 = vpop.permute.xlu0 %1943
  %1947 = vset.pattern.permute.xlu0 0
  %1948 = vperm.xlu0 %1947, %v1874
  %v1949 = vpop.permute.xlu0 %1948
  %1952 = vset.pattern.permute.xlu0 0
  %1953 = vperm.xlu0 %1952, %v1875
  %v1954 = vpop.permute.xlu0 %1953
  %1957 = vset.pattern.permute.xlu0 0
  %1958 = vperm.xlu0 %1957, %v1876
  %v1959 = vpop.permute.xlu0 %1958
  %1962 = vset.pattern.permute.xlu0 0
  %1963 = vperm.xlu0 %1962, %v1877
  %v1964 = vpop.permute.xlu0 %1963
  %1967 = vset.pattern.permute.xlu0 0
  %1968 = vperm.xlu0 %1967, %v1878
  %v1969 = vpop.permute.xlu0 %1968
  %1972 = vset.pattern.permute.xlu0 0
  %1973 = vperm.xlu0 %1972, %v1879
  %v1974 = vpop.permute.xlu0 %1973
  %1977 = vset.pattern.permute.xlu0 0
  %1978 = vperm.xlu0 %1977, %v1880
  %v1979 = vpop.permute.xlu0 %1978
  %1982 = vset.pattern.permute.xlu0 0
  %1983 = vperm.xlu0 %1982, %v1881
  %v1984 = vpop.permute.xlu0 %1983
  %1987 = vset.pattern.permute.xlu0 0
  %1988 = vperm.xlu0 %1987, %v1882
  %v1989 = vpop.permute.xlu0 %1988
  %1992 = vset.pattern.permute.xlu0 0
  %1993 = vperm.xlu0 %1992, %v1883
  %v1994 = vpop.permute.xlu0 %1993
  %1997 = vset.pattern.permute.xlu0 0
  %1998 = vperm.xlu0 %1997, %v1884
  %v1999 = vpop.permute.xlu0 %1998
  %2002 = vset.pattern.permute.xlu0 0
  %2003 = vperm.xlu0 %2002, %v1885
  %v2004 = vpop.permute.xlu0 %2003
  %2007 = vset.pattern.permute.xlu0 0
  %2008 = vperm.xlu0 %2007, %v1886
  %v2009 = vpop.permute.xlu0 %2008
  %2012 = vset.pattern.permute.xlu0 0
  %2013 = vperm.xlu0 %2012, %v1887
  %v2014 = vpop.permute.xlu0 %2013
  %2017 = vset.pattern.permute.xlu0 0
  %2018 = vperm.xlu0 %2017, %v1888
  %v2019 = vpop.permute.xlu0 %2018
  %2022 = vset.pattern.permute.xlu0 0
  %2023 = vperm.xlu0 %2022, %v1889
  %v2024 = vpop.permute.xlu0 %2023
  %2027 = vset.pattern.permute.xlu0 0
  %2028 = vperm.xlu0 %2027, %v1890
  %v2029 = vpop.permute.xlu0 %2028
  %2032 = vset.pattern.permute.xlu0 0
  %2033 = vperm.xlu0 %2032, %v1891
  %v2034 = vpop.permute.xlu0 %2033
  %2037 = vset.pattern.permute.xlu0 0
  %2038 = vperm.xlu0 %2037, %v1892
  %v2039 = vpop.permute.xlu0 %2038
  %2042 = vset.pattern.permute.xlu0 0
  %2043 = vperm.xlu0 %2042, %v1893
  %v2044 = vpop.permute.xlu0 %2043
  %2047 = vset.pattern.permute.xlu0 0
  %2048 = vperm.xlu0 %2047, %v1894
  %v2049 = vpop.permute.xlu0 %2048
  %2052 = vset.pattern.permute.xlu0 0
  %2053 = vperm.xlu0 %2052, %v1895
  %v2054 = vpop.permute.xlu0 %2053
  %v2056 = vadd.f32 %v1800, %v1899
  %v2057 = vadd.f32 %v1801, %v1899
  %v2058 = vadd.f32 %v1802, %v1904
  %v2059 = vadd.f32 %v1803, %v1904
  %v2060 = vadd.f32 %v1804, %v1909
  %v2061 = vadd.f32 %v1805, %v1909
  %v2062 = vadd.f32 %v1806, %v1914
  %v2063 = vadd.f32 %v1807, %v1914
  %v2064 = vadd.f32 %v1808, %v1919
  %v2065 = vadd.f32 %v1809, %v1919
  %v2066 = vadd.f32 %v1810, %v1924
  %v2067 = vadd.f32 %v1811, %v1924
  %v2068 = vadd.f32 %v1812, %v1929
  %v2069 = vadd.f32 %v1813, %v1929
  %v2070 = vadd.f32 %v1814, %v1934
  %v2071 = vadd.f32 %v1815, %v1934
  %v2072 = vadd.f32 %v1816, %v1939
  %v2073 = vadd.f32 %v1817, %v1939
  %v2074 = vadd.f32 %v1818, %v1944
  %v2075 = vadd.f32 %v1819, %v1944
  %v2076 = vadd.f32 %v1820, %v1949
  %v2077 = vadd.f32 %v1821, %v1949
  %v2078 = vadd.f32 %v1822, %v1954
  %v2079 = vadd.f32 %v1823, %v1954
  %v2080 = vadd.f32 %v1824, %v1959
  %v2081 = vadd.f32 %v1825, %v1959
  %v2082 = vadd.f32 %v1826, %v1964
  %v2083 = vadd.f32 %v1827, %v1964
  %v2084 = vadd.f32 %v1828, %v1969
  %v2085 = vadd.f32 %v1829, %v1969
  %v2086 = vadd.f32 %v1830, %v1974
  %v2087 = vadd.f32 %v1831, %v1974
  %v2088 = vadd.f32 %v1832, %v1979
  %v2089 = vadd.f32 %v1833, %v1979
  %v2090 = vadd.f32 %v1834, %v1984
  %v2091 = vadd.f32 %v1835, %v1984
  %v2092 = vadd.f32 %v1836, %v1989
  %v2093 = vadd.f32 %v1837, %v1989
  %v2094 = vadd.f32 %v1838, %v1994
  %v2095 = vadd.f32 %v1839, %v1994
  %v2096 = vadd.f32 %v1840, %v1999
  %v2097 = vadd.f32 %v1841, %v1999
  %v2098 = vadd.f32 %v1842, %v2004
  %v2099 = vadd.f32 %v1843, %v2004
  %v2100 = vadd.f32 %v1844, %v2009
  %v2101 = vadd.f32 %v1845, %v2009
  %v2102 = vadd.f32 %v1846, %v2014
  %v2103 = vadd.f32 %v1847, %v2014
  %v2104 = vadd.f32 %v1848, %v2019
  %v2105 = vadd.f32 %v1849, %v2019
  %v2106 = vadd.f32 %v1850, %v2024
  %v2107 = vadd.f32 %v1851, %v2024
  %v2108 = vadd.f32 %v1852, %v2029
  %v2109 = vadd.f32 %v1853, %v2029
  %v2110 = vadd.f32 %v1854, %v2034
  %v2111 = vadd.f32 %v1855, %v2034
  %v2112 = vadd.f32 %v1856, %v2039
  %v2113 = vadd.f32 %v1857, %v2039
  %v2114 = vadd.f32 %v1858, %v2044
  %v2115 = vadd.f32 %v1859, %v2044
  %v2116 = vadd.f32 %v1860, %v2049
  %v2117 = vadd.f32 %v1861, %v2049
  %v2118 = vadd.f32 %v1862, %v2054
  %v2119 = vadd.f32 %v1863, %v2054
  %2120 = vst [vmem:[%s4] sm:$0xff] %v2056
  %2121 = vst [vmem:[%s4 + $0x8] sm:$0xff] %v2057
  %2122 = vst [vmem:[%s4 + $0x10] sm:$0x3] %v2058
  %2123 = vst [vmem:[%s4 + $0x18] sm:$0x3] %v2059
  %2124 = vst [vmem:[%s4 + $0x20] sm:$0xff] %v2060
  %2125 = vst [vmem:[%s4 + $0x28] sm:$0xff] %v2061
  %2126 = vst [vmem:[%s4 + $0x30] sm:$0x3] %v2062
  %2127 = vst [vmem:[%s4 + $0x38] sm:$0x3] %v2063
  %2128 = vst [vmem:[%s4 + $0x40] sm:$0xff] %v2064
  %2129 = vst [vmem:[%s4 + $0x48] sm:$0xff] %v2065
  %2130 = vst [vmem:[%s4 + $0x50] sm:$0x3] %v2066
  %2131 = vst [vmem:[%s4 + $0x58] sm:$0x3] %v2067
  %2132 = vst [vmem:[%s4 + $0x60] sm:$0xff] %v2068
  %2133 = vst [vmem:[%s4 + $0x68] sm:$0xff] %v2069
  %2134 = vst [vmem:[%s4 + $0x70] sm:$0x3] %v2070
  %2135 = vst [vmem:[%s4 + $0x78] sm:$0x3] %v2071
  %2136 = vst [vmem:[%s4 + $0x80] sm:$0xff] %v2072
  %2137 = vst [vmem:[%s4 + $0x88] sm:$0xff] %v2073
  %2138 = vst [vmem:[%s4 + $0x90] sm:$0x3] %v2074
  %2139 = vst [vmem:[%s4 + $0x98] sm:$0x3] %v2075
  %2140 = vst [vmem:[%s4 + $0xa0] sm:$0xff] %v2076
  %2141 = vst [vmem:[%s4 + $0xa8] sm:$0xff] %v2077
  %2142 = vst [vmem:[%s4 + $0xb0] sm:$0x3] %v2078
  %2143 = vst [vmem:[%s4 + $0xb8] sm:$0x3] %v2079
  %2144 = vst [vmem:[%s4 + $0xc0] sm:$0xff] %v2080
  %2145 = vst [vmem:[%s4 + $0xc8] sm:$0xff] %v2081
  %2146 = vst [vmem:[%s4 + $0xd0] sm:$0x3] %v2082
  %2147 = vst [vmem:[%s4 + $0xd8] sm:$0x3] %v2083
  %2148 = vst [vmem:[%s4 + $0xe0] sm:$0xff] %v2084
  %2149 = vst [vmem:[%s4 + $0xe8] sm:$0xff] %v2085
  %2150 = vst [vmem:[%s4 + $0xf0] sm:$0x3] %v2086
  %2151 = vst [vmem:[%s4 + $0xf8] sm:$0x3] %v2087
  %2152 = vst [vmem:[%s4 + $0x100] sm:$0xff] %v2088
  %2153 = vst [vmem:[%s4 + $0x108] sm:$0xff] %v2089
  %2154 = vst [vmem:[%s4 + $0x110] sm:$0x3] %v2090
  %2155 = vst [vmem:[%s4 + $0x118] sm:$0x3] %v2091
  %2156 = vst [vmem:[%s4 + $0x120] sm:$0xff] %v2092
  %2157 = vst [vmem:[%s4 + $0x128] sm:$0xff] %v2093
  %2158 = vst [vmem:[%s4 + $0x130] sm:$0x3] %v2094
  %2159 = vst [vmem:[%s4 + $0x138] sm:$0x3] %v2095
  %2160 = vst [vmem:[%s4 + $0x140] sm:$0xff] %v2096
  %2161 = vst [vmem:[%s4 + $0x148] sm:$0xff] %v2097
  %2162 = vst [vmem:[%s4 + $0x150] sm:$0x3] %v2098
  %2163 = vst [vmem:[%s4 + $0x158] sm:$0x3] %v2099
  %2164 = vst [vmem:[%s4 + $0x160] sm:$0xff] %v2100
  %2165 = vst [vmem:[%s4 + $0x168] sm:$0xff] %v2101
  %2166 = vst [vmem:[%s4 + $0x170] sm:$0x3] %v2102
  %2167 = vst [vmem:[%s4 + $0x178] sm:$0x3] %v2103
  %2168 = vst [vmem:[%s4 + $0x180] sm:$0xff] %v2104
  %2169 = vst [vmem:[%s4 + $0x188] sm:$0xff] %v2105
  %2170 = vst [vmem:[%s4 + $0x190] sm:$0x3] %v2106
  %2171 = vst [vmem:[%s4 + $0x198] sm:$0x3] %v2107
  %2172 = vst [vmem:[%s4 + $0x1a0] sm:$0xff] %v2108
  %2173 = vst [vmem:[%s4 + $0x1a8] sm:$0xff] %v2109
  %2174 = vst [vmem:[%s4 + $0x1b0] sm:$0x3] %v2110
  %2175 = vst [vmem:[%s4 + $0x1b8] sm:$0x3] %v2111
  %2176 = vst [vmem:[%s4 + $0x1c0] sm:$0xff] %v2112
  %2177 = vst [vmem:[%s4 + $0x1c8] sm:$0xff] %v2113
  %2178 = vst [vmem:[%s4 + $0x1d0] sm:$0x3] %v2114
  %2179 = vst [vmem:[%s4 + $0x1d8] sm:$0x3] %v2115
  %2180 = vst [vmem:[%s4 + $0x1e0] sm:$0xff] %v2116
  %2181 = vst [vmem:[%s4 + $0x1e8] sm:$0xff] %v2117
  %2182 = vst [vmem:[%s4 + $0x1f0] sm:$0x3] %v2118
  %2183 = vst [vmem:[%s4 + $0x1f8] sm:$0x3] %v2119
  // Predicated region
  $region18: #{tpu_custom_call.1} parent=0 // pred_check
    _
  $region19: #{tpu_custom_call.1} parent=0 // pred_check_branch
    %2185 = sbr.rel (0) target = $region21
  $region20: #{tpu_custom_call.1} parent=0 // pred_region
    _
  $region21: #{tpu_custom_call.1} parent=0 // pred_fallthru
    _
  // Predicated region
  $region22: #{tpu_custom_call.1} parent=0 // pred_check
    _
  $region23: #{tpu_custom_call.1} parent=0 // pred_check_branch
    %2187 = sbr.rel (0) target = $region25
  $region24: #{tpu_custom_call.1} parent=0 // pred_region
    _
  $region25: #{tpu_custom_call.1} parent=0 // pred_fallthru
    _

</llo_original>
